<compile_context>
chip_gen: v7x
topology: tpu7x:2x2x1
jax: 0.10.0
libtpu: 0.0.40
codegen_flags: <defaults>
</compile_context>

<pallas_src>
import jax
import jax.numpy as jnp
from jax.experimental import pallas as pl
from jax.experimental.pallas import tpu as pltpu


def _make_dilconv_kernel(K, dilation, Wp, L_acc):
    """Build the fused kernel with static conv geometry baked in."""

    def kernel(x_ref, dw_ref, pw_ref, b_ref, o_ref):
        # x_ref : (1, S, C_in)   flat zero-padded NHWC slab for one image
        # dw_ref: (K*K, C_in)    depthwise taps (tap-major, channel on lanes)
        # pw_ref: (C_in, C_out)  1x1 conv weights with BN scale folded in
        # b_ref : (1, C_out)     folded BN bias
        # o_ref : (1, L_acc, C_out)
        acc = None
        for ky in range(K):
            for kx in range(K):
                off = ky * dilation * Wp + kx * dilation          # static shift
                win = x_ref[0, off:off + L_acc, :]                # (L_acc, C_in)
                win = jnp.maximum(win, 0.0).astype(jnp.float32)   # fused ReLU
                w_tap = dw_ref[ky * K + kx:ky * K + kx + 1, :]    # (1, C_in)
                contrib = win * w_tap                             # VPU MAC
                acc = contrib if acc is None else acc + contrib
        # Pointwise 1x1 conv (+ folded BN) on the MXU.
        y = jnp.dot(acc, pw_ref[...], preferred_element_type=jnp.float32)
        y = y + b_ref[...]                                        # (L_acc, C_out)
        o_ref[0] = y.astype(o_ref.dtype)

    return kernel


def dilconv_forward(x, dw_w, pw_w, gamma, beta, running_mean, running_var, *,
                    stride=1, padding=2, dilation=2, eps=1e-5):
    """Forward pass of DilConv.

    x           : (N, C_in, H, W)  NCHW, float32 (PyTorch layout)
    dw_w        : (C_in, K, K)     depthwise conv weight (groups=C_in, squeezed)
    pw_w        : (C_out, C_in)    1x1 conv weight (squeezed)
    gamma/beta/running_mean/running_var : (C_out,) BatchNorm parameters/buffers
    """
    # TODO(synk): stride > 1 (strided tap slices) not implemented in this kernel.
    assert stride == 1, "only stride=1 is supported by this kernel"
    N, C_in, H, W = x.shape
    C_out = pw_w.shape[0]
    K = dw_w.shape[-1]

    ek = dilation * (K - 1) + 1                      # effective kernel extent
    HO = (H + 2 * padding - ek) // stride + 1
    WO = (W + 2 * padding - ek) // stride + 1
    Wp = W + 2 * padding
    # Extra bottom rows so the largest shifted tap slice stays in bounds
    # (it only ever feeds columns that get cropped afterwards).
    extra = -(-(dilation * (K - 1)) // Wp)
    Hp_ext = H + 2 * padding + extra
    S = Hp_ext * Wp                                  # flat slab length per image
    L = HO * Wp                                      # flat output length per image

    # NCHW -> NHWC once, zero-pad spatially once (ReLU(0)==0, so padding before the
    # in-kernel ReLU is equivalent), flatten spatial dims -> channel-last 2-D slab.
    x_nhwc = jnp.transpose(x, (0, 2, 3, 1))
    x_pad = jnp.pad(
        x_nhwc, ((0, 0), (padding, padding + extra), (padding, padding), (0, 0)))
    x_flat = x_pad.reshape(N, S, C_in)

    # Depthwise taps: row (ky*K+kx) holds the per-channel weight for that tap.
    dw_flat = jnp.transpose(dw_w.reshape(C_in, K * K), (1, 0)).astype(jnp.float32)

    # Fold eval-mode BatchNorm (running stats + affine) into the 1x1 conv.
    # AdaptiveBatchNorm2d skips normalization entirely when the spatial height is 1.
    # TODO(synk): training-mode batch statistics / running-stat updates not implemented.
    if HO == 1:
        scale = jnp.ones((C_out,), jnp.float32)
        shift = jnp.zeros((C_out,), jnp.float32)
    else:
        scale = gamma / jnp.sqrt(running_var + eps)
        shift = beta - scale * running_mean
    pw_folded = (jnp.transpose(pw_w, (1, 0)) * scale[None, :]).astype(jnp.float32)
    bias_folded = shift.reshape(1, C_out).astype(jnp.float32)

    kernel = _make_dilconv_kernel(K, dilation, Wp, L)

    out_flat = pl.pallas_call(
        kernel,
        out_shape=jax.ShapeDtypeStruct((N, L, C_out), x.dtype),
        grid_spec=pltpu.PrefetchScalarGridSpec(
            num_scalar_prefetch=0,
            grid=(N,),
            in_specs=[
                pl.BlockSpec((1, S, C_in), lambda n: (n, 0, 0)),
                pl.BlockSpec((K * K, C_in), lambda n: (0, 0)),
                pl.BlockSpec((C_in, C_out), lambda n: (0, 0)),
                pl.BlockSpec((1, C_out), lambda n: (0, 0)),
            ],
            out_specs=pl.BlockSpec((1, L, C_out), lambda n: (n, 0, 0)),
        ),
        compiler_params=pltpu.CompilerParams(
            dimension_semantics=("parallel",),
            vmem_limit_bytes=32 * 1024 * 1024,
        ),
    )(x_flat, dw_flat, pw_folded, bias_folded)

    # Drop the horizontal-padding (garbage) columns and return to NCHW.
    out = out_flat.reshape(N, HO, Wp, C_out)[:, :, :WO, :]
    return jnp.transpose(out, (0, 3, 1, 2))


def dilconv_reference(x, dw_w, pw_w, gamma, beta, running_mean, running_var, *,
                      stride=1, padding=2, dilation=2, eps=1e-5):
    """Pure-JAX reference of the same forward pass (eval-mode BN)."""
    C_in = x.shape[1]
    xr = jnp.maximum(x, 0.0)
    d = jax.lax.conv_general_dilated(
        xr, dw_w[:, None, :, :],
        window_strides=(stride, stride),
        padding=((padding, padding), (padding, padding)),
        rhs_dilation=(dilation, dilation),
        dimension_numbers=("NCHW", "OIHW", "NCHW"),
        feature_group_count=C_in,
        precision=jax.lax.Precision.HIGHEST,
    )
    p = jnp.einsum("nchw,oc->nohw", d, pw_w, precision=jax.lax.Precision.HIGHEST)
    if p.shape[-2] == 1:
        return p
    scale = gamma / jnp.sqrt(running_var + eps)
    return (p * scale[None, :, None, None]
            + (beta - scale * running_mean)[None, :, None, None])


if __name__ == "__main__":
    key = jax.random.PRNGKey(0)
    N, C_in, H, W = 2, 4, 16, 16
    C_out = 8
    K, stride, padding, dilation = 3, 1, 2, 2
    eps = 1e-5

    k1, k2, k3, k4, k5, k6, k7 = jax.random.split(key, 7)
    x = jax.random.normal(k1, (N, C_in, H, W), dtype=jnp.float32)
    dw_w = 0.2 * jax.random.normal(k2, (C_in, K, K), dtype=jnp.float32)
    pw_w = 0.2 * jax.random.normal(k3, (C_out, C_in), dtype=jnp.float32)
    gamma = 1.0 + 0.1 * jax.random.normal(k4, (C_out,), dtype=jnp.float32)
    beta = 0.1 * jax.random.normal(k5, (C_out,), dtype=jnp.float32)
    running_mean = 0.1 * jax.random.normal(k6, (C_out,), dtype=jnp.float32)
    running_var = jnp.abs(1.0 + 0.1 * jax.random.normal(k7, (C_out,), dtype=jnp.float32))

    y = dilconv_forward(x, dw_w, pw_w, gamma, beta, running_mean, running_var,
                        stride=stride, padding=padding, dilation=dilation, eps=eps)
    y = jax.block_until_ready(y)

    y_ref = dilconv_reference(x, dw_w, pw_w, gamma, beta, running_mean, running_var,
                              stride=stride, padding=padding, dilation=dilation, eps=eps)

    assert y.shape == (N, C_out, H, W) and y.dtype == x.dtype
    max_err = float(jnp.max(jnp.abs(y - y_ref)))
    assert max_err < 1e-2, f"max abs err {max_err}"
    print("KERNEL_OK")
</pallas_src>

<mosaic_0001>
module attributes {stable_mosaic.version = 11 : i64} {
  func.func @kernel(%arg0: i32, %arg1: memref<1x420x4xf32, #tpu.memory_space<vmem>>, %arg2: memref<9x4xf32, #tpu.memory_space<vmem>>, %arg3: memref<4x8xf32, #tpu.memory_space<vmem>>, %arg4: memref<1x8xf32, #tpu.memory_space<vmem>>, %arg5: memref<1x320x8xf32, #tpu.memory_space<vmem>>) attributes {dimension_semantics = [#tpu.dimension_semantics<parallel>], iteration_bounds = array<i64: 2>, scalar_prefetch = 0 : i64, scratch_operands = 0 : i64, tpu.core_type = #tpu.core_type<tc>, window_params = [{transform_indices = @transform_0, window_bounds = array<i64: 1, 420, 4>}, {pipeline_mode = #tpu.pipeline_mode<synchronous>, transform_indices = @transform_1, window_bounds = array<i64: 9, 4>}, {pipeline_mode = #tpu.pipeline_mode<synchronous>, transform_indices = @transform_2, window_bounds = array<i64: 4, 8>}, {pipeline_mode = #tpu.pipeline_mode<synchronous>, transform_indices = @transform_3, window_bounds = array<i64: 1, 8>}, {transform_indices = @transform_4, window_bounds = array<i64: 1, 320, 8>}]} {
    %c0 = arith.constant 0 : index
    %c0_0 = arith.constant 0 : index
    %c0_1 = arith.constant 0 : index
    %0 = vector.load %arg1[%c0, %c0_0, %c0_1] : memref<1x420x4xf32, #tpu.memory_space<vmem>>, vector<1x320x4xf32>
    %1 = vector.shape_cast %0 : vector<1x320x4xf32> to vector<320x4xf32>
    %cst = arith.constant 0.000000e+00 : f32
    %2 = vector.broadcast %cst : f32 to vector<320x4xf32>
    %3 = arith.maximumf %1, %2 : vector<320x4xf32>
    %c0_2 = arith.constant 0 : index
    %c0_3 = arith.constant 0 : index
    %4 = vector.load %arg2[%c0_2, %c0_3] : memref<9x4xf32, #tpu.memory_space<vmem>>, vector<1x4xf32>
    %5 = vector.broadcast %4 : vector<1x4xf32> to vector<320x4xf32>
    %6 = arith.mulf %3, %5 : vector<320x4xf32>
    %c0_4 = arith.constant 0 : index
    %c2 = arith.constant 2 : index
    %c0_5 = arith.constant 0 : index
    %7 = vector.load %arg1[%c0_4, %c2, %c0_5] : memref<1x420x4xf32, #tpu.memory_space<vmem>>, vector<1x320x4xf32>
    %8 = vector.shape_cast %7 : vector<1x320x4xf32> to vector<320x4xf32>
    %cst_6 = arith.constant 0.000000e+00 : f32
    %9 = vector.broadcast %cst_6 : f32 to vector<320x4xf32>
    %10 = arith.maximumf %8, %9 : vector<320x4xf32>
    %c1 = arith.constant 1 : index
    %c0_7 = arith.constant 0 : index
    %11 = vector.load %arg2[%c1, %c0_7] : memref<9x4xf32, #tpu.memory_space<vmem>>, vector<1x4xf32>
    %12 = vector.broadcast %11 : vector<1x4xf32> to vector<320x4xf32>
    %13 = arith.mulf %10, %12 : vector<320x4xf32>
    %14 = arith.addf %6, %13 : vector<320x4xf32>
    %c0_8 = arith.constant 0 : index
    %c4 = arith.constant 4 : index
    %c0_9 = arith.constant 0 : index
    %15 = vector.load %arg1[%c0_8, %c4, %c0_9] : memref<1x420x4xf32, #tpu.memory_space<vmem>>, vector<1x320x4xf32>
    %16 = vector.shape_cast %15 : vector<1x320x4xf32> to vector<320x4xf32>
    %cst_10 = arith.constant 0.000000e+00 : f32
    %17 = vector.broadcast %cst_10 : f32 to vector<320x4xf32>
    %18 = arith.maximumf %16, %17 : vector<320x4xf32>
    %c2_11 = arith.constant 2 : index
    %c0_12 = arith.constant 0 : index
    %19 = vector.load %arg2[%c2_11, %c0_12] : memref<9x4xf32, #tpu.memory_space<vmem>>, vector<1x4xf32>
    %20 = vector.broadcast %19 : vector<1x4xf32> to vector<320x4xf32>
    %21 = arith.mulf %18, %20 : vector<320x4xf32>
    %22 = arith.addf %14, %21 : vector<320x4xf32>
    %c0_13 = arith.constant 0 : index
    %c40 = arith.constant 40 : index
    %c0_14 = arith.constant 0 : index
    %23 = vector.load %arg1[%c0_13, %c40, %c0_14] : memref<1x420x4xf32, #tpu.memory_space<vmem>>, vector<1x320x4xf32>
    %24 = vector.shape_cast %23 : vector<1x320x4xf32> to vector<320x4xf32>
    %cst_15 = arith.constant 0.000000e+00 : f32
    %25 = vector.broadcast %cst_15 : f32 to vector<320x4xf32>
    %26 = arith.maximumf %24, %25 : vector<320x4xf32>
    %c3 = arith.constant 3 : index
    %c0_16 = arith.constant 0 : index
    %27 = vector.load %arg2[%c3, %c0_16] : memref<9x4xf32, #tpu.memory_space<vmem>>, vector<1x4xf32>
    %28 = vector.broadcast %27 : vector<1x4xf32> to vector<320x4xf32>
    %29 = arith.mulf %26, %28 : vector<320x4xf32>
    %30 = arith.addf %22, %29 : vector<320x4xf32>
    %c0_17 = arith.constant 0 : index
    %c42 = arith.constant 42 : index
    %c0_18 = arith.constant 0 : index
    %31 = vector.load %arg1[%c0_17, %c42, %c0_18] : memref<1x420x4xf32, #tpu.memory_space<vmem>>, vector<1x320x4xf32>
    %32 = vector.shape_cast %31 : vector<1x320x4xf32> to vector<320x4xf32>
    %cst_19 = arith.constant 0.000000e+00 : f32
    %33 = vector.broadcast %cst_19 : f32 to vector<320x4xf32>
    %34 = arith.maximumf %32, %33 : vector<320x4xf32>
    %c4_20 = arith.constant 4 : index
    %c0_21 = arith.constant 0 : index
    %35 = vector.load %arg2[%c4_20, %c0_21] : memref<9x4xf32, #tpu.memory_space<vmem>>, vector<1x4xf32>
    %36 = vector.broadcast %35 : vector<1x4xf32> to vector<320x4xf32>
    %37 = arith.mulf %34, %36 : vector<320x4xf32>
    %38 = arith.addf %30, %37 : vector<320x4xf32>
    %c0_22 = arith.constant 0 : index
    %c44 = arith.constant 44 : index
    %c0_23 = arith.constant 0 : index
    %39 = vector.load %arg1[%c0_22, %c44, %c0_23] : memref<1x420x4xf32, #tpu.memory_space<vmem>>, vector<1x320x4xf32>
    %40 = vector.shape_cast %39 : vector<1x320x4xf32> to vector<320x4xf32>
    %cst_24 = arith.constant 0.000000e+00 : f32
    %41 = vector.broadcast %cst_24 : f32 to vector<320x4xf32>
    %42 = arith.maximumf %40, %41 : vector<320x4xf32>
    %c5 = arith.constant 5 : index
    %c0_25 = arith.constant 0 : index
    %43 = vector.load %arg2[%c5, %c0_25] : memref<9x4xf32, #tpu.memory_space<vmem>>, vector<1x4xf32>
    %44 = vector.broadcast %43 : vector<1x4xf32> to vector<320x4xf32>
    %45 = arith.mulf %42, %44 : vector<320x4xf32>
    %46 = arith.addf %38, %45 : vector<320x4xf32>
    %c0_26 = arith.constant 0 : index
    %c80 = arith.constant 80 : index
    %c0_27 = arith.constant 0 : index
    %47 = vector.load %arg1[%c0_26, %c80, %c0_27] : memref<1x420x4xf32, #tpu.memory_space<vmem>>, vector<1x320x4xf32>
    %48 = vector.shape_cast %47 : vector<1x320x4xf32> to vector<320x4xf32>
    %cst_28 = arith.constant 0.000000e+00 : f32
    %49 = vector.broadcast %cst_28 : f32 to vector<320x4xf32>
    %50 = arith.maximumf %48, %49 : vector<320x4xf32>
    %c6 = arith.constant 6 : index
    %c0_29 = arith.constant 0 : index
    %51 = vector.load %arg2[%c6, %c0_29] : memref<9x4xf32, #tpu.memory_space<vmem>>, vector<1x4xf32>
    %52 = vector.broadcast %51 : vector<1x4xf32> to vector<320x4xf32>
    %53 = arith.mulf %50, %52 : vector<320x4xf32>
    %54 = arith.addf %46, %53 : vector<320x4xf32>
    %c0_30 = arith.constant 0 : index
    %c82 = arith.constant 82 : index
    %c0_31 = arith.constant 0 : index
    %55 = vector.load %arg1[%c0_30, %c82, %c0_31] : memref<1x420x4xf32, #tpu.memory_space<vmem>>, vector<1x320x4xf32>
    %56 = vector.shape_cast %55 : vector<1x320x4xf32> to vector<320x4xf32>
    %cst_32 = arith.constant 0.000000e+00 : f32
    %57 = vector.broadcast %cst_32 : f32 to vector<320x4xf32>
    %58 = arith.maximumf %56, %57 : vector<320x4xf32>
    %c7 = arith.constant 7 : index
    %c0_33 = arith.constant 0 : index
    %59 = vector.load %arg2[%c7, %c0_33] : memref<9x4xf32, #tpu.memory_space<vmem>>, vector<1x4xf32>
    %60 = vector.broadcast %59 : vector<1x4xf32> to vector<320x4xf32>
    %61 = arith.mulf %58, %60 : vector<320x4xf32>
    %62 = arith.addf %54, %61 : vector<320x4xf32>
    %c0_34 = arith.constant 0 : index
    %c84 = arith.constant 84 : index
    %c0_35 = arith.constant 0 : index
    %63 = vector.load %arg1[%c0_34, %c84, %c0_35] : memref<1x420x4xf32, #tpu.memory_space<vmem>>, vector<1x320x4xf32>
    %64 = vector.shape_cast %63 : vector<1x320x4xf32> to vector<320x4xf32>
    %cst_36 = arith.constant 0.000000e+00 : f32
    %65 = vector.broadcast %cst_36 : f32 to vector<320x4xf32>
    %66 = arith.maximumf %64, %65 : vector<320x4xf32>
    %c8 = arith.constant 8 : index
    %c0_37 = arith.constant 0 : index
    %67 = vector.load %arg2[%c8, %c0_37] : memref<9x4xf32, #tpu.memory_space<vmem>>, vector<1x4xf32>
    %68 = vector.broadcast %67 : vector<1x4xf32> to vector<320x4xf32>
    %69 = arith.mulf %66, %68 : vector<320x4xf32>
    %70 = arith.addf %62, %69 : vector<320x4xf32>
    %c0_38 = arith.constant 0 : index
    %c0_39 = arith.constant 0 : index
    %71 = vector.load %arg3[%c0_38, %c0_39] : memref<4x8xf32, #tpu.memory_space<vmem>>, vector<4x8xf32>
    %cst_40 = arith.constant dense<0.000000e+00> : vector<320x8xf32>
    %72 = tpu.matmul %70, %71, %cst_40 {dimension_numbers = #tpu.dot_dimension_numbers<[1], [0], [0], [1], [0, 0, 1, 1], [], []>} : vector<320x4xf32>, vector<4x8xf32>, vector<320x8xf32> -> vector<320x8xf32>
    %c0_41 = arith.constant 0 : index
    %c0_42 = arith.constant 0 : index
    %73 = vector.load %arg4[%c0_41, %c0_42] : memref<1x8xf32, #tpu.memory_space<vmem>>, vector<1x8xf32>
    %74 = vector.broadcast %73 : vector<1x8xf32> to vector<320x8xf32>
    %75 = arith.addf %72, %74 : vector<320x8xf32>
    %c0_43 = arith.constant 0 : index
    %c0_44 = arith.constant 0 : index
    %c0_45 = arith.constant 0 : index
    %76 = vector.load %arg5[%c0_43, %c0_44, %c0_45] : memref<1x320x8xf32, #tpu.memory_space<vmem>>, vector<1x320x8xf32>
    %77 = vector.shape_cast %76 : vector<1x320x8xf32> to vector<320x8xf32>
    %78 = vector.shape_cast %75 : vector<320x8xf32> to vector<1x320x8xf32>
    tpu.vector_store %arg5[%c0_43, %c0_44, %c0_45], %78 {strides = array<i32>} : memref<1x320x8xf32, #tpu.memory_space<vmem>>, vector<1x320x8xf32>,
    return
  }
  func.func @transform_0(%arg0: i32) -> (i32, i32, i32) {
    %c0_i32 = arith.constant 0 : i32
    %c0_i32_0 = arith.constant 0 : i32
    %c0_i32_1 = arith.constant 0 : i32
    return %arg0, %c0_i32, %c0_i32_0 : i32, i32, i32
  }
  func.func @transform_1(%arg0: i32) -> (i32, i32) {
    %c0_i32 = arith.constant 0 : i32
    %c0_i32_0 = arith.constant 0 : i32
    %c0_i32_1 = arith.constant 0 : i32
    return %c0_i32, %c0_i32_0 : i32, i32
  }
  func.func @transform_2(%arg0: i32) -> (i32, i32) {
    %c0_i32 = arith.constant 0 : i32
    %c0_i32_0 = arith.constant 0 : i32
    %c0_i32_1 = arith.constant 0 : i32
    return %c0_i32, %c0_i32_0 : i32, i32
  }
  func.func @transform_3(%arg0: i32) -> (i32, i32) {
    %c0_i32 = arith.constant 0 : i32
    %c0_i32_0 = arith.constant 0 : i32
    %c0_i32_1 = arith.constant 0 : i32
    return %c0_i32, %c0_i32_0 : i32, i32
  }
  func.func @transform_4(%arg0: i32) -> (i32, i32, i32) {
    %c0_i32 = arith.constant 0 : i32
    %c0_i32_0 = arith.constant 0 : i32
    %c0_i32_1 = arith.constant 0 : i32
    return %arg0, %c0_i32, %c0_i32_0 : i32, i32, i32
  }
}

</mosaic_0001>

<llo_original>
// kernel: tpu_custom_call.1
$region0: #{tpu_custom_call.1}
  #allocation0 [shape = 'u32[]', space=smem, size = 0x4, offset = 0x4, fixed_abs, tag = 'smem constant byte address 0x4 - core index']
  #allocation1 [shape = 'u32[144,128]{1,0:T(1,128)}', space=vmem, size = 0x12000, scoped, tag = 'internal scratch']
  %s0 = inlined_call_operand.vmem [shape: f32[2,420,4], index: 0, kind: input, shape index: {}]
  %s1 = inlined_call_operand.vmem [shape: f32[9,4], index: 1, kind: input, shape index: {}]
  %s2 = inlined_call_operand.vmem [shape: f32[4,8], index: 2, kind: input, shape index: {}]
  %s3 = inlined_call_operand.vmem [shape: f32[1,8], index: 3, kind: input, shape index: {}]
  %s4 = inlined_call_operand.vmem [shape: f32[2,320,8], index: 4, kind: output, shape index: {}]
  %s5 = sld [smem:[#allocation0]]
  $region49: #{tpu_custom_call.1} parent=0
    _
  %s7 = ssub.s32 1, %s5
  %s8 = scalar_select 0, %s7, %s5
  loop: start=0, step=1, limit=4
  $region2: #{tpu_custom_call.1} parent=0 // loop_pre_header
    _
  $region3: #{tpu_custom_call.1} parent=0 // loop_header
    %s10 = sphi 0, %s14
    %p11 = scmp.ge.s32.totalorder %s10, 4
    %s20 = sphi 0, %s22
    %s23 = sphi 0, %s20
    %s24 = sphi 0, %s23
    %s40 = sphi 0, %s24
    %s44 = sphi 0, %s44
    %s46 = sphi 0, %s44
    %s47 = sphi 0, %s46
    %s61 = sphi 0, %s47
    %s65 = sphi 0, %s65
    %s67 = sphi 0, %s65
    %s68 = sphi 0, %s67
    %s82 = sphi 0, %s68
    %s86 = sphi 0, %s86
    %s88 = sphi 0, %s86
    %s89 = sphi 0, %s88
    %s103 = sphi 0, %s89
    %s109 = sphi 0, %s111
    %s112 = sphi 0, %s109
    %s113 = sphi 0, %s112
    %s129 = sphi 0, %s113
  $region4: #{tpu_custom_call.1} parent=0 // loop_header_branch
    %13 = sbr.rel (%p11) target = $region8
  $region5: #{tpu_custom_call.1} parent=0 // loop_body
    %s15 = ssub.s32 %s10, 1
    %s16 = ssub.s32 %s10, 2
    %s17 = sadd.s32 %s10, 1
    %s18 = ssub.s32 %s10, %s17
    %p19 = scmp.eq.s32.totalorder %s18, 0
    %s21 = sadd.s32 %s20, 1
    %s22 = scalar_select %p19, %s20, %s21
    %p25 = pneg %p19
    %p26 = scmp.eq.s32.totalorder %s10, 1
    %p27 = por %p25, %p26
    %p28 = scmp.ne.s32.totalorder %s20, %s23
    %p29 = scmp.eq.s32.totalorder %s10, 0
    %p30 = por %p28, %p29
    %p31 = scmp.ne.s32.totalorder %s20, %s23
    %p32 = scmp.eq.s32.totalorder %s15, 1
    %p33 = por %p31, %p32
    %p34 = scmp.ne.s32.totalorder %s23, %s24
    %p35 = scmp.eq.s32.totalorder %s15, 0
    %p36 = por %p34, %p35
    %p37 = scmp.ne.s32.totalorder %s23, %s24
    %p38 = scmp.eq.s32.totalorder %s16, 1
    %p39 = por %p37, %p38
    %p41 = scmp.ne.s32.totalorder %s24, %s40
    %p42 = scmp.eq.s32.totalorder %s16, 0
    %p43 = por %p41, %p42
    %s45 = sadd.s32 %s44, 1
    %p48 = scmp.eq.s32.totalorder %s10, 1
    %p49 = scmp.ne.s32.totalorder %s44, %s46
    %p50 = scmp.eq.s32.totalorder %s10, 0
    %p51 = por %p49, %p50
    %p52 = scmp.ne.s32.totalorder %s44, %s46
    %p53 = scmp.eq.s32.totalorder %s15, 1
    %p54 = por %p52, %p53
    %p55 = scmp.ne.s32.totalorder %s46, %s47
    %p56 = scmp.eq.s32.totalorder %s15, 0
    %p57 = por %p55, %p56
    %p58 = scmp.ne.s32.totalorder %s46, %s47
    %p59 = scmp.eq.s32.totalorder %s16, 1
    %p60 = por %p58, %p59
    %p62 = scmp.ne.s32.totalorder %s47, %s61
    %p63 = scmp.eq.s32.totalorder %s16, 0
    %p64 = por %p62, %p63
    %s66 = sadd.s32 %s65, 1
    %p69 = scmp.eq.s32.totalorder %s10, 1
    %p70 = scmp.ne.s32.totalorder %s65, %s67
    %p71 = scmp.eq.s32.totalorder %s10, 0
    %p72 = por %p70, %p71
    %p73 = scmp.ne.s32.totalorder %s65, %s67
    %p74 = scmp.eq.s32.totalorder %s15, 1
    %p75 = por %p73, %p74
    %p76 = scmp.ne.s32.totalorder %s67, %s68
    %p77 = scmp.eq.s32.totalorder %s15, 0
    %p78 = por %p76, %p77
    %p79 = scmp.ne.s32.totalorder %s67, %s68
    %p80 = scmp.eq.s32.totalorder %s16, 1
    %p81 = por %p79, %p80
    %p83 = scmp.ne.s32.totalorder %s68, %s82
    %p84 = scmp.eq.s32.totalorder %s16, 0
    %p85 = por %p83, %p84
    %s87 = sadd.s32 %s86, 1
    %p90 = scmp.eq.s32.totalorder %s10, 1
    %p91 = scmp.ne.s32.totalorder %s86, %s88
    %p92 = scmp.eq.s32.totalorder %s10, 0
    %p93 = por %p91, %p92
    %p94 = scmp.ne.s32.totalorder %s86, %s88
    %p95 = scmp.eq.s32.totalorder %s15, 1
    %p96 = por %p94, %p95
    %p97 = scmp.ne.s32.totalorder %s88, %s89
    %p98 = scmp.eq.s32.totalorder %s15, 0
    %p99 = por %p97, %p98
    %p100 = scmp.ne.s32.totalorder %s88, %s89
    %p101 = scmp.eq.s32.totalorder %s16, 1
    %p102 = por %p100, %p101
    %p104 = scmp.ne.s32.totalorder %s89, %s103
    %p105 = scmp.eq.s32.totalorder %s16, 0
    %p106 = por %p104, %p105
    %s107 = ssub.s32 %s10, %s17
    %p108 = scmp.eq.s32.totalorder %s107, 0
    %s110 = sadd.s32 %s109, 1
    %s111 = scalar_select %p108, %s109, %s110
    %p114 = pneg %p108
    %p115 = scmp.eq.s32.totalorder %s10, 1
    %p116 = por %p114, %p115
    %p117 = scmp.ne.s32.totalorder %s109, %s112
    %p118 = scmp.eq.s32.totalorder %s10, 0
    %p119 = por %p117, %p118
    %p120 = scmp.ne.s32.totalorder %s109, %s112
    %p121 = scmp.eq.s32.totalorder %s15, 1
    %p122 = por %p120, %p121
    %p123 = scmp.ne.s32.totalorder %s112, %s113
    %p124 = scmp.eq.s32.totalorder %s15, 0
    %p125 = por %p123, %p124
    %p126 = scmp.ne.s32.totalorder %s112, %s113
    %p127 = scmp.eq.s32.totalorder %s16, 1
    %p128 = por %p126, %p127
    %p130 = scmp.ne.s32.totalorder %s113, %s129
    %p131 = scmp.eq.s32.totalorder %s16, 0
    %p132 = por %p130, %p131
    %p133 = scmp.le.s32.totalorder 1, %s10
    %p134 = scmp.lt.s32.totalorder %s10, 3
    %p135 = pnand %p133, %p134
    %p136 = pneg %p135
    // Predicated region
    $region9: #{tpu_custom_call.1} parent=5 // pred_check
      _
    $region10: #{tpu_custom_call.1} parent=5 // pred_check_branch
      %138 = sbr.rel (%p135) target = $region12
    $region11: #{tpu_custom_call.1} parent=5 // pred_region
      %s139 = ssub.s32 %s10, 1
      // Predicated region
      $region13: #{tpu_custom_call.1} parent=11 // pred_check
        %p140 = pneg %p57
      $region14: #{tpu_custom_call.1} parent=11 // pred_check_branch
        %142 = sbr.rel (%p140) target = $region16
      $region15: #{tpu_custom_call.1} parent=11 // pred_region
        _
      $region16: #{tpu_custom_call.1} parent=11 // pred_fallthru
        _
      // Predicated region
      $region17: #{tpu_custom_call.1} parent=11 // pred_check
        %p143 = pneg %p78
      $region18: #{tpu_custom_call.1} parent=11 // pred_check_branch
        %145 = sbr.rel (%p143) target = $region20
      $region19: #{tpu_custom_call.1} parent=11 // pred_region
        _
      $region20: #{tpu_custom_call.1} parent=11 // pred_fallthru
        _
      // Predicated region
      $region21: #{tpu_custom_call.1} parent=11 // pred_check
        %p146 = pneg %p99
      $region22: #{tpu_custom_call.1} parent=11 // pred_check_branch
        %148 = sbr.rel (%p146) target = $region24
      $region23: #{tpu_custom_call.1} parent=11 // pred_region
        _
      $region24: #{tpu_custom_call.1} parent=11 // pred_fallthru
        _
    $region12: #{tpu_custom_call.1} parent=5 // pred_fallthru
      _
    %p149 = scmp.lt.s32.totalorder %s10, 2
    // Predicated region
    $region25: #{tpu_custom_call.1} parent=5 // pred_check
      %p150 = pneg %p149
    $region26: #{tpu_custom_call.1} parent=5 // pred_check_branch
      %152 = sbr.rel (%p150) target = $region28
    $region27: #{tpu_custom_call.1} parent=5 // pred_region
      // Predicated region
      $region29: #{tpu_custom_call.1} parent=27 // pred_check
        %p153 = pneg %p30
      $region30: #{tpu_custom_call.1} parent=27 // pred_check_branch
        %155 = sbr.rel (%p153) target = $region32
      $region31: #{tpu_custom_call.1} parent=27 // pred_region
        %p156 = scmp.lt.s32.totalorder %s10, 1
        %s157 = scalar_select %p156, %s10, 1
        %s158 = smul.addr %s157, 53
        %s159 = smul.addr %s158, 8
        %s160 = scalar_lea.vmem %s0, %s159
      $region32: #{tpu_custom_call.1} parent=27 // pred_fallthru
        _
    $region28: #{tpu_custom_call.1} parent=5 // pred_fallthru
      _
    %p161 = scmp.le.s32.totalorder 1, %s10
    %p162 = scmp.lt.s32.totalorder %s10, 3
    %p163 = pnand %p161, %p162
    %p164 = pneg %p163
    // Predicated region
    $region33: #{tpu_custom_call.1} parent=5 // pred_check
      _
    $region34: #{tpu_custom_call.1} parent=5 // pred_check_branch
      %166 = sbr.rel (%p163) target = $region36
    $region35: #{tpu_custom_call.1} parent=5 // pred_region
      %s167 = ssub.s32 %s10, 1
      %p168 = scmp.lt.s32.totalorder %s15, 1
      %s169 = scalar_select %p168, %s15, 1
      %s170 = smul.addr %s169, 53
      %s171 = smul.addr %s170, 8
      %s172 = scalar_lea.vmem %s0, %s171
      %p173 = pneg %p36
      %p174 = pneg %p33
      %p175 = pneg %p57
      %p176 = pneg %p54
      %p177 = pneg %p78
      %p178 = pneg %p75
      %p179 = pneg %p99
      %p180 = pneg %p96
      %p181 = pneg %p125
      %p182 = pneg %p122
      %p183 = scmp.lt.s32.totalorder %s15, 1
      %s184 = scalar_select %p183, %s15, 1
      %s185 = smul.addr %s184, 40
      %s186 = smul.addr %s185, 8
      %s187 = scalar_lea.vmem %s4, %s186
      %p188 = scmp.lt.s32.totalorder %s15, 1
      %s189 = scalar_select %p188, %s15, 1
      %s190 = smul.addr %s189, 53
      %s191 = smul.addr %s190, 8
      %s192 = scalar_lea.vmem %s0, %s191
      %p193 = scmp.lt.s32.totalorder %s15, 1
      %s194 = scalar_select %p193, %s15, 1
      %s195 = smul.addr %s194, 40
      %s196 = smul.addr %s195, 8
      %s197 = scalar_lea.vmem %s4, %s196
      %v198 = vld [vmem:[%s192] sm:$0xff]
      %v199 = vld [vmem:[%s192 + $0x8] sm:$0xff]
      %v200 = vld [vmem:[%s192 + $0x10] sm:$0xff]
      %v201 = vld [vmem:[%s192 + $0x18] sm:$0xff]
      %v202 = vld [vmem:[%s192 + $0x20] sm:$0xff]
      %v203 = vld [vmem:[%s192 + $0x28] sm:$0xff]
      %v204 = vld [vmem:[%s192 + $0x30] sm:$0xff]
      %v205 = vld [vmem:[%s192 + $0x38] sm:$0xff]
      %v206 = vld [vmem:[%s192 + $0x40] sm:$0xff]
      %v207 = vld [vmem:[%s192 + $0x48] sm:$0xff]
      %v208 = vld [vmem:[%s192 + $0x50] sm:$0xff]
      %v209 = vld [vmem:[%s192 + $0x58] sm:$0xff]
      %v210 = vld [vmem:[%s192 + $0x60] sm:$0xff]
      %v211 = vld [vmem:[%s192 + $0x68] sm:$0xff]
      %v212 = vld [vmem:[%s192 + $0x70] sm:$0xff]
      %v213 = vld [vmem:[%s192 + $0x78] sm:$0xff]
      %v214 = vld [vmem:[%s192 + $0x80] sm:$0xff]
      %v215 = vld [vmem:[%s192 + $0x88] sm:$0xff]
      %v216 = vld [vmem:[%s192 + $0x90] sm:$0xff]
      %v217 = vld [vmem:[%s192 + $0x98] sm:$0xff]
      %v218 = vld [vmem:[%s192 + $0xa0] sm:$0xff]
      %v219 = vld [vmem:[%s192 + $0xa8] sm:$0xff]
      %v220 = vld [vmem:[%s192 + $0xb0] sm:$0xff]
      %v221 = vld [vmem:[%s192 + $0xb8] sm:$0xff]
      %v222 = vld [vmem:[%s192 + $0xc0] sm:$0xff]
      %v223 = vld [vmem:[%s192 + $0xc8] sm:$0xff]
      %v224 = vld [vmem:[%s192 + $0xd0] sm:$0xff]
      %v225 = vld [vmem:[%s192 + $0xd8] sm:$0xff]
      %v226 = vld [vmem:[%s192 + $0xe0] sm:$0xff]
      %v227 = vld [vmem:[%s192 + $0xe8] sm:$0xff]
      %v228 = vld [vmem:[%s192 + $0xf0] sm:$0xff]
      %v229 = vld [vmem:[%s192 + $0xf8] sm:$0xff]
      %v230 = vld [vmem:[%s192 + $0x100] sm:$0xff]
      %v231 = vld [vmem:[%s192 + $0x108] sm:$0xff]
      %v232 = vld [vmem:[%s192 + $0x110] sm:$0xff]
      %v233 = vld [vmem:[%s192 + $0x118] sm:$0xff]
      %v234 = vld [vmem:[%s192 + $0x120] sm:$0xff]
      %v235 = vld [vmem:[%s192 + $0x128] sm:$0xff]
      %v236 = vld [vmem:[%s192 + $0x130] sm:$0xff]
      %v237 = vld [vmem:[%s192 + $0x138] sm:$0xff]
      %v238 = vmax.f32 %v198, 0.0
      %v239 = vmax.f32 %v199, 0.0
      %v240 = vmax.f32 %v200, 0.0
      %v241 = vmax.f32 %v201, 0.0
      %v242 = vmax.f32 %v202, 0.0
      %v243 = vmax.f32 %v203, 0.0
      %v244 = vmax.f32 %v204, 0.0
      %v245 = vmax.f32 %v205, 0.0
      %v246 = vmax.f32 %v206, 0.0
      %v247 = vmax.f32 %v207, 0.0
      %v248 = vmax.f32 %v208, 0.0
      %v249 = vmax.f32 %v209, 0.0
      %v250 = vmax.f32 %v210, 0.0
      %v251 = vmax.f32 %v211, 0.0
      %v252 = vmax.f32 %v212, 0.0
      %v253 = vmax.f32 %v213, 0.0
      %v254 = vmax.f32 %v214, 0.0
      %v255 = vmax.f32 %v215, 0.0
      %v256 = vmax.f32 %v216, 0.0
      %v257 = vmax.f32 %v217, 0.0
      %v258 = vmax.f32 %v218, 0.0
      %v259 = vmax.f32 %v219, 0.0
      %v260 = vmax.f32 %v220, 0.0
      %v261 = vmax.f32 %v221, 0.0
      %v262 = vmax.f32 %v222, 0.0
      %v263 = vmax.f32 %v223, 0.0
      %v264 = vmax.f32 %v224, 0.0
      %v265 = vmax.f32 %v225, 0.0
      %v266 = vmax.f32 %v226, 0.0
      %v267 = vmax.f32 %v227, 0.0
      %v268 = vmax.f32 %v228, 0.0
      %v269 = vmax.f32 %v229, 0.0
      %v270 = vmax.f32 %v230, 0.0
      %v271 = vmax.f32 %v231, 0.0
      %v272 = vmax.f32 %v232, 0.0
      %v273 = vmax.f32 %v233, 0.0
      %v274 = vmax.f32 %v234, 0.0
      %v275 = vmax.f32 %v235, 0.0
      %v276 = vmax.f32 %v236, 0.0
      %v277 = vmax.f32 %v237, 0.0
      %v278 = vld [vmem:[%s1] sm:$0x1]
      %v279 = vlaneseq
      %v280 = vshrl.u32 %v279, 7
      %v281 = vsub.s32 0, %v280
      %v282 = vrot.slane %v278, %v281
      %v283 = vmul.f32 %v238, %v282
      %v284 = vmul.f32 %v239, %v282
      %v285 = vmul.f32 %v240, %v282
      %v286 = vmul.f32 %v241, %v282
      %v287 = vmul.f32 %v242, %v282
      %v288 = vmul.f32 %v243, %v282
      %v289 = vmul.f32 %v244, %v282
      %v290 = vmul.f32 %v245, %v282
      %v291 = vmul.f32 %v246, %v282
      %v292 = vmul.f32 %v247, %v282
      %v293 = vmul.f32 %v248, %v282
      %v294 = vmul.f32 %v249, %v282
      %v295 = vmul.f32 %v250, %v282
      %v296 = vmul.f32 %v251, %v282
      %v297 = vmul.f32 %v252, %v282
      %v298 = vmul.f32 %v253, %v282
      %v299 = vmul.f32 %v254, %v282
      %v300 = vmul.f32 %v255, %v282
      %v301 = vmul.f32 %v256, %v282
      %v302 = vmul.f32 %v257, %v282
      %v303 = vmul.f32 %v258, %v282
      %v304 = vmul.f32 %v259, %v282
      %v305 = vmul.f32 %v260, %v282
      %v306 = vmul.f32 %v261, %v282
      %v307 = vmul.f32 %v262, %v282
      %v308 = vmul.f32 %v263, %v282
      %v309 = vmul.f32 %v264, %v282
      %v310 = vmul.f32 %v265, %v282
      %v311 = vmul.f32 %v266, %v282
      %v312 = vmul.f32 %v267, %v282
      %v313 = vmul.f32 %v268, %v282
      %v314 = vmul.f32 %v269, %v282
      %v315 = vmul.f32 %v270, %v282
      %v316 = vmul.f32 %v271, %v282
      %v317 = vmul.f32 %v272, %v282
      %v318 = vmul.f32 %v273, %v282
      %v319 = vmul.f32 %v274, %v282
      %v320 = vmul.f32 %v275, %v282
      %v321 = vmul.f32 %v276, %v282
      %v322 = vmul.f32 %v277, %v282
      %v323 = vld [vmem:[%s192 + $0x2] sm:$0xff]
      %v324 = vld [vmem:[%s192 + $0xa] sm:$0xff]
      %v325 = vld [vmem:[%s192 + $0x12] sm:$0xff]
      %v326 = vld [vmem:[%s192 + $0x1a] sm:$0xff]
      %v327 = vld [vmem:[%s192 + $0x22] sm:$0xff]
      %v328 = vld [vmem:[%s192 + $0x2a] sm:$0xff]
      %v329 = vld [vmem:[%s192 + $0x32] sm:$0xff]
      %v330 = vld [vmem:[%s192 + $0x3a] sm:$0xff]
      %v331 = vld [vmem:[%s192 + $0x42] sm:$0xff]
      %v332 = vld [vmem:[%s192 + $0x4a] sm:$0xff]
      %v333 = vld [vmem:[%s192 + $0x52] sm:$0xff]
      %v334 = vld [vmem:[%s192 + $0x5a] sm:$0xff]
      %v335 = vld [vmem:[%s192 + $0x62] sm:$0xff]
      %v336 = vld [vmem:[%s192 + $0x6a] sm:$0xff]
      %v337 = vld [vmem:[%s192 + $0x72] sm:$0xff]
      %v338 = vld [vmem:[%s192 + $0x7a] sm:$0xff]
      %v339 = vld [vmem:[%s192 + $0x82] sm:$0xff]
      %v340 = vld [vmem:[%s192 + $0x8a] sm:$0xff]
      %v341 = vld [vmem:[%s192 + $0x92] sm:$0xff]
      %v342 = vld [vmem:[%s192 + $0x9a] sm:$0xff]
      %v343 = vld [vmem:[%s192 + $0xa2] sm:$0xff]
      %v344 = vld [vmem:[%s192 + $0xaa] sm:$0xff]
      %v345 = vld [vmem:[%s192 + $0xb2] sm:$0xff]
      %v346 = vld [vmem:[%s192 + $0xba] sm:$0xff]
      %v347 = vld [vmem:[%s192 + $0xc2] sm:$0xff]
      %v348 = vld [vmem:[%s192 + $0xca] sm:$0xff]
      %v349 = vld [vmem:[%s192 + $0xd2] sm:$0xff]
      %v350 = vld [vmem:[%s192 + $0xda] sm:$0xff]
      %v351 = vld [vmem:[%s192 + $0xe2] sm:$0xff]
      %v352 = vld [vmem:[%s192 + $0xea] sm:$0xff]
      %v353 = vld [vmem:[%s192 + $0xf2] sm:$0xff]
      %v354 = vld [vmem:[%s192 + $0xfa] sm:$0xff]
      %v355 = vld [vmem:[%s192 + $0x102] sm:$0xff]
      %v356 = vld [vmem:[%s192 + $0x10a] sm:$0xff]
      %v357 = vld [vmem:[%s192 + $0x112] sm:$0xff]
      %v358 = vld [vmem:[%s192 + $0x11a] sm:$0xff]
      %v359 = vld [vmem:[%s192 + $0x122] sm:$0xff]
      %v360 = vld [vmem:[%s192 + $0x12a] sm:$0xff]
      %v361 = vld [vmem:[%s192 + $0x132] sm:$0xff]
      %v362 = vld [vmem:[%s192 + $0x13a] sm:$0xff]
      %v363 = vmax.f32 %v323, 0.0
      %v364 = vmax.f32 %v324, 0.0
      %v365 = vmax.f32 %v325, 0.0
      %v366 = vmax.f32 %v326, 0.0
      %v367 = vmax.f32 %v327, 0.0
      %v368 = vmax.f32 %v328, 0.0
      %v369 = vmax.f32 %v329, 0.0
      %v370 = vmax.f32 %v330, 0.0
      %v371 = vmax.f32 %v331, 0.0
      %v372 = vmax.f32 %v332, 0.0
      %v373 = vmax.f32 %v333, 0.0
      %v374 = vmax.f32 %v334, 0.0
      %v375 = vmax.f32 %v335, 0.0
      %v376 = vmax.f32 %v336, 0.0
      %v377 = vmax.f32 %v337, 0.0
      %v378 = vmax.f32 %v338, 0.0
      %v379 = vmax.f32 %v339, 0.0
      %v380 = vmax.f32 %v340, 0.0
      %v381 = vmax.f32 %v341, 0.0
      %v382 = vmax.f32 %v342, 0.0
      %v383 = vmax.f32 %v343, 0.0
      %v384 = vmax.f32 %v344, 0.0
      %v385 = vmax.f32 %v345, 0.0
      %v386 = vmax.f32 %v346, 0.0
      %v387 = vmax.f32 %v347, 0.0
      %v388 = vmax.f32 %v348, 0.0
      %v389 = vmax.f32 %v349, 0.0
      %v390 = vmax.f32 %v350, 0.0
      %v391 = vmax.f32 %v351, 0.0
      %v392 = vmax.f32 %v352, 0.0
      %v393 = vmax.f32 %v353, 0.0
      %v394 = vmax.f32 %v354, 0.0
      %v395 = vmax.f32 %v355, 0.0
      %v396 = vmax.f32 %v356, 0.0
      %v397 = vmax.f32 %v357, 0.0
      %v398 = vmax.f32 %v358, 0.0
      %v399 = vmax.f32 %v359, 0.0
      %v400 = vmax.f32 %v360, 0.0
      %v401 = vmax.f32 %v361, 0.0
      %v402 = vmax.f32 %v362, 0.0
      %v403 = vld [vmem:[%s1 + $0x1] sm:$0x1]
      %v404 = vlaneseq
      %v405 = vshrl.u32 %v404, 7
      %v406 = vsub.s32 0, %v405
      %v407 = vrot.slane %v403, %v406
      %v408 = vmul.f32 %v363, %v407
      %v409 = vmul.f32 %v364, %v407
      %v410 = vmul.f32 %v365, %v407
      %v411 = vmul.f32 %v366, %v407
      %v412 = vmul.f32 %v367, %v407
      %v413 = vmul.f32 %v368, %v407
      %v414 = vmul.f32 %v369, %v407
      %v415 = vmul.f32 %v370, %v407
      %v416 = vmul.f32 %v371, %v407
      %v417 = vmul.f32 %v372, %v407
      %v418 = vmul.f32 %v373, %v407
      %v419 = vmul.f32 %v374, %v407
      %v420 = vmul.f32 %v375, %v407
      %v421 = vmul.f32 %v376, %v407
      %v422 = vmul.f32 %v377, %v407
      %v423 = vmul.f32 %v378, %v407
      %v424 = vmul.f32 %v379, %v407
      %v425 = vmul.f32 %v380, %v407
      %v426 = vmul.f32 %v381, %v407
      %v427 = vmul.f32 %v382, %v407
      %v428 = vmul.f32 %v383, %v407
      %v429 = vmul.f32 %v384, %v407
      %v430 = vmul.f32 %v385, %v407
      %v431 = vmul.f32 %v386, %v407
      %v432 = vmul.f32 %v387, %v407
      %v433 = vmul.f32 %v388, %v407
      %v434 = vmul.f32 %v389, %v407
      %v435 = vmul.f32 %v390, %v407
      %v436 = vmul.f32 %v391, %v407
      %v437 = vmul.f32 %v392, %v407
      %v438 = vmul.f32 %v393, %v407
      %v439 = vmul.f32 %v394, %v407
      %v440 = vmul.f32 %v395, %v407
      %v441 = vmul.f32 %v396, %v407
      %v442 = vmul.f32 %v397, %v407
      %v443 = vmul.f32 %v398, %v407
      %v444 = vmul.f32 %v399, %v407
      %v445 = vmul.f32 %v400, %v407
      %v446 = vmul.f32 %v401, %v407
      %v447 = vmul.f32 %v402, %v407
      %v448 = vadd.f32 %v283, %v408
      %v449 = vadd.f32 %v284, %v409
      %v450 = vadd.f32 %v285, %v410
      %v451 = vadd.f32 %v286, %v411
      %v452 = vadd.f32 %v287, %v412
      %v453 = vadd.f32 %v288, %v413
      %v454 = vadd.f32 %v289, %v414
      %v455 = vadd.f32 %v290, %v415
      %v456 = vadd.f32 %v291, %v416
      %v457 = vadd.f32 %v292, %v417
      %v458 = vadd.f32 %v293, %v418
      %v459 = vadd.f32 %v294, %v419
      %v460 = vadd.f32 %v295, %v420
      %v461 = vadd.f32 %v296, %v421
      %v462 = vadd.f32 %v297, %v422
      %v463 = vadd.f32 %v298, %v423
      %v464 = vadd.f32 %v299, %v424
      %v465 = vadd.f32 %v300, %v425
      %v466 = vadd.f32 %v301, %v426
      %v467 = vadd.f32 %v302, %v427
      %v468 = vadd.f32 %v303, %v428
      %v469 = vadd.f32 %v304, %v429
      %v470 = vadd.f32 %v305, %v430
      %v471 = vadd.f32 %v306, %v431
      %v472 = vadd.f32 %v307, %v432
      %v473 = vadd.f32 %v308, %v433
      %v474 = vadd.f32 %v309, %v434
      %v475 = vadd.f32 %v310, %v435
      %v476 = vadd.f32 %v311, %v436
      %v477 = vadd.f32 %v312, %v437
      %v478 = vadd.f32 %v313, %v438
      %v479 = vadd.f32 %v314, %v439
      %v480 = vadd.f32 %v315, %v440
      %v481 = vadd.f32 %v316, %v441
      %v482 = vadd.f32 %v317, %v442
      %v483 = vadd.f32 %v318, %v443
      %v484 = vadd.f32 %v319, %v444
      %v485 = vadd.f32 %v320, %v445
      %v486 = vadd.f32 %v321, %v446
      %v487 = vadd.f32 %v322, %v447
      %v488 = vld [vmem:[%s192 + $0x4] sm:$0xff]
      %v489 = vld [vmem:[%s192 + $0xc] sm:$0xff]
      %v490 = vld [vmem:[%s192 + $0x14] sm:$0xff]
      %v491 = vld [vmem:[%s192 + $0x1c] sm:$0xff]
      %v492 = vld [vmem:[%s192 + $0x24] sm:$0xff]
      %v493 = vld [vmem:[%s192 + $0x2c] sm:$0xff]
      %v494 = vld [vmem:[%s192 + $0x34] sm:$0xff]
      %v495 = vld [vmem:[%s192 + $0x3c] sm:$0xff]
      %v496 = vld [vmem:[%s192 + $0x44] sm:$0xff]
      %v497 = vld [vmem:[%s192 + $0x4c] sm:$0xff]
      %v498 = vld [vmem:[%s192 + $0x54] sm:$0xff]
      %v499 = vld [vmem:[%s192 + $0x5c] sm:$0xff]
      %v500 = vld [vmem:[%s192 + $0x64] sm:$0xff]
      %v501 = vld [vmem:[%s192 + $0x6c] sm:$0xff]
      %v502 = vld [vmem:[%s192 + $0x74] sm:$0xff]
      %v503 = vld [vmem:[%s192 + $0x7c] sm:$0xff]
      %v504 = vld [vmem:[%s192 + $0x84] sm:$0xff]
      %v505 = vld [vmem:[%s192 + $0x8c] sm:$0xff]
      %v506 = vld [vmem:[%s192 + $0x94] sm:$0xff]
      %v507 = vld [vmem:[%s192 + $0x9c] sm:$0xff]
      %v508 = vld [vmem:[%s192 + $0xa4] sm:$0xff]
      %v509 = vld [vmem:[%s192 + $0xac] sm:$0xff]
      %v510 = vld [vmem:[%s192 + $0xb4] sm:$0xff]
      %v511 = vld [vmem:[%s192 + $0xbc] sm:$0xff]
      %v512 = vld [vmem:[%s192 + $0xc4] sm:$0xff]
      %v513 = vld [vmem:[%s192 + $0xcc] sm:$0xff]
      %v514 = vld [vmem:[%s192 + $0xd4] sm:$0xff]
      %v515 = vld [vmem:[%s192 + $0xdc] sm:$0xff]
      %v516 = vld [vmem:[%s192 + $0xe4] sm:$0xff]
      %v517 = vld [vmem:[%s192 + $0xec] sm:$0xff]
      %v518 = vld [vmem:[%s192 + $0xf4] sm:$0xff]
      %v519 = vld [vmem:[%s192 + $0xfc] sm:$0xff]
      %v520 = vld [vmem:[%s192 + $0x104] sm:$0xff]
      %v521 = vld [vmem:[%s192 + $0x10c] sm:$0xff]
      %v522 = vld [vmem:[%s192 + $0x114] sm:$0xff]
      %v523 = vld [vmem:[%s192 + $0x11c] sm:$0xff]
      %v524 = vld [vmem:[%s192 + $0x124] sm:$0xff]
      %v525 = vld [vmem:[%s192 + $0x12c] sm:$0xff]
      %v526 = vld [vmem:[%s192 + $0x134] sm:$0xff]
      %v527 = vld [vmem:[%s192 + $0x13c] sm:$0xff]
      %v528 = vmax.f32 %v488, 0.0
      %v529 = vmax.f32 %v489, 0.0
      %v530 = vmax.f32 %v490, 0.0
      %v531 = vmax.f32 %v491, 0.0
      %v532 = vmax.f32 %v492, 0.0
      %v533 = vmax.f32 %v493, 0.0
      %v534 = vmax.f32 %v494, 0.0
      %v535 = vmax.f32 %v495, 0.0
      %v536 = vmax.f32 %v496, 0.0
      %v537 = vmax.f32 %v497, 0.0
      %v538 = vmax.f32 %v498, 0.0
      %v539 = vmax.f32 %v499, 0.0
      %v540 = vmax.f32 %v500, 0.0
      %v541 = vmax.f32 %v501, 0.0
      %v542 = vmax.f32 %v502, 0.0
      %v543 = vmax.f32 %v503, 0.0
      %v544 = vmax.f32 %v504, 0.0
      %v545 = vmax.f32 %v505, 0.0
      %v546 = vmax.f32 %v506, 0.0
      %v547 = vmax.f32 %v507, 0.0
      %v548 = vmax.f32 %v508, 0.0
      %v549 = vmax.f32 %v509, 0.0
      %v550 = vmax.f32 %v510, 0.0
      %v551 = vmax.f32 %v511, 0.0
      %v552 = vmax.f32 %v512, 0.0
      %v553 = vmax.f32 %v513, 0.0
      %v554 = vmax.f32 %v514, 0.0
      %v555 = vmax.f32 %v515, 0.0
      %v556 = vmax.f32 %v516, 0.0
      %v557 = vmax.f32 %v517, 0.0
      %v558 = vmax.f32 %v518, 0.0
      %v559 = vmax.f32 %v519, 0.0
      %v560 = vmax.f32 %v520, 0.0
      %v561 = vmax.f32 %v521, 0.0
      %v562 = vmax.f32 %v522, 0.0
      %v563 = vmax.f32 %v523, 0.0
      %v564 = vmax.f32 %v524, 0.0
      %v565 = vmax.f32 %v525, 0.0
      %v566 = vmax.f32 %v526, 0.0
      %v567 = vmax.f32 %v527, 0.0
      %v568 = vld [vmem:[%s1 + $0x2] sm:$0x1]
      %v569 = vlaneseq
      %v570 = vshrl.u32 %v569, 7
      %v571 = vsub.s32 0, %v570
      %v572 = vrot.slane %v568, %v571
      %v573 = vmul.f32 %v528, %v572
      %v574 = vmul.f32 %v529, %v572
      %v575 = vmul.f32 %v530, %v572
      %v576 = vmul.f32 %v531, %v572
      %v577 = vmul.f32 %v532, %v572
      %v578 = vmul.f32 %v533, %v572
      %v579 = vmul.f32 %v534, %v572
      %v580 = vmul.f32 %v535, %v572
      %v581 = vmul.f32 %v536, %v572
      %v582 = vmul.f32 %v537, %v572
      %v583 = vmul.f32 %v538, %v572
      %v584 = vmul.f32 %v539, %v572
      %v585 = vmul.f32 %v540, %v572
      %v586 = vmul.f32 %v541, %v572
      %v587 = vmul.f32 %v542, %v572
      %v588 = vmul.f32 %v543, %v572
      %v589 = vmul.f32 %v544, %v572
      %v590 = vmul.f32 %v545, %v572
      %v591 = vmul.f32 %v546, %v572
      %v592 = vmul.f32 %v547, %v572
      %v593 = vmul.f32 %v548, %v572
      %v594 = vmul.f32 %v549, %v572
      %v595 = vmul.f32 %v550, %v572
      %v596 = vmul.f32 %v551, %v572
      %v597 = vmul.f32 %v552, %v572
      %v598 = vmul.f32 %v553, %v572
      %v599 = vmul.f32 %v554, %v572
      %v600 = vmul.f32 %v555, %v572
      %v601 = vmul.f32 %v556, %v572
      %v602 = vmul.f32 %v557, %v572
      %v603 = vmul.f32 %v558, %v572
      %v604 = vmul.f32 %v559, %v572
      %v605 = vmul.f32 %v560, %v572
      %v606 = vmul.f32 %v561, %v572
      %v607 = vmul.f32 %v562, %v572
      %v608 = vmul.f32 %v563, %v572
      %v609 = vmul.f32 %v564, %v572
      %v610 = vmul.f32 %v565, %v572
      %v611 = vmul.f32 %v566, %v572
      %v612 = vmul.f32 %v567, %v572
      %v613 = vadd.f32 %v448, %v573
      %v614 = vadd.f32 %v449, %v574
      %v615 = vadd.f32 %v450, %v575
      %v616 = vadd.f32 %v451, %v576
      %v617 = vadd.f32 %v452, %v577
      %v618 = vadd.f32 %v453, %v578
      %v619 = vadd.f32 %v454, %v579
      %v620 = vadd.f32 %v455, %v580
      %v621 = vadd.f32 %v456, %v581
      %v622 = vadd.f32 %v457, %v582
      %v623 = vadd.f32 %v458, %v583
      %v624 = vadd.f32 %v459, %v584
      %v625 = vadd.f32 %v460, %v585
      %v626 = vadd.f32 %v461, %v586
      %v627 = vadd.f32 %v462, %v587
      %v628 = vadd.f32 %v463, %v588
      %v629 = vadd.f32 %v464, %v589
      %v630 = vadd.f32 %v465, %v590
      %v631 = vadd.f32 %v466, %v591
      %v632 = vadd.f32 %v467, %v592
      %v633 = vadd.f32 %v468, %v593
      %v634 = vadd.f32 %v469, %v594
      %v635 = vadd.f32 %v470, %v595
      %v636 = vadd.f32 %v471, %v596
      %v637 = vadd.f32 %v472, %v597
      %v638 = vadd.f32 %v473, %v598
      %v639 = vadd.f32 %v474, %v599
      %v640 = vadd.f32 %v475, %v600
      %v641 = vadd.f32 %v476, %v601
      %v642 = vadd.f32 %v477, %v602
      %v643 = vadd.f32 %v478, %v603
      %v644 = vadd.f32 %v479, %v604
      %v645 = vadd.f32 %v480, %v605
      %v646 = vadd.f32 %v481, %v606
      %v647 = vadd.f32 %v482, %v607
      %v648 = vadd.f32 %v483, %v608
      %v649 = vadd.f32 %v484, %v609
      %v650 = vadd.f32 %v485, %v610
      %v651 = vadd.f32 %v486, %v611
      %v652 = vadd.f32 %v487, %v612
      %v653 = vld [vmem:[%s192 + $0x140] sm:$0xff]
      %v654 = vld [vmem:[%s192 + $0x148] sm:$0xff]
      %v655 = vld [vmem:[%s192 + $0x150] sm:$0xff]
      %v656 = vld [vmem:[%s192 + $0x158] sm:$0xff]
      %v657 = vld [vmem:[%s192 + $0x160] sm:$0xff]
      %v658 = vmax.f32 %v653, 0.0
      %v659 = vmax.f32 %v654, 0.0
      %v660 = vmax.f32 %v655, 0.0
      %v661 = vmax.f32 %v656, 0.0
      %v662 = vmax.f32 %v657, 0.0
      %v663 = vld [vmem:[%s1 + $0x3] sm:$0x1]
      %v664 = vlaneseq
      %v665 = vshrl.u32 %v664, 7
      %v666 = vsub.s32 0, %v665
      %v667 = vrot.slane %v663, %v666
      %v668 = vmul.f32 %v243, %v667
      %v669 = vmul.f32 %v244, %v667
      %v670 = vmul.f32 %v245, %v667
      %v671 = vmul.f32 %v246, %v667
      %v672 = vmul.f32 %v247, %v667
      %v673 = vmul.f32 %v248, %v667
      %v674 = vmul.f32 %v249, %v667
      %v675 = vmul.f32 %v250, %v667
      %v676 = vmul.f32 %v251, %v667
      %v677 = vmul.f32 %v252, %v667
      %v678 = vmul.f32 %v253, %v667
      %v679 = vmul.f32 %v254, %v667
      %v680 = vmul.f32 %v255, %v667
      %v681 = vmul.f32 %v256, %v667
      %v682 = vmul.f32 %v257, %v667
      %v683 = vmul.f32 %v258, %v667
      %v684 = vmul.f32 %v259, %v667
      %v685 = vmul.f32 %v260, %v667
      %v686 = vmul.f32 %v261, %v667
      %v687 = vmul.f32 %v262, %v667
      %v688 = vmul.f32 %v263, %v667
      %v689 = vmul.f32 %v264, %v667
      %v690 = vmul.f32 %v265, %v667
      %v691 = vmul.f32 %v266, %v667
      %v692 = vmul.f32 %v267, %v667
      %v693 = vmul.f32 %v268, %v667
      %v694 = vmul.f32 %v269, %v667
      %v695 = vmul.f32 %v270, %v667
      %v696 = vmul.f32 %v271, %v667
      %v697 = vmul.f32 %v272, %v667
      %v698 = vmul.f32 %v273, %v667
      %v699 = vmul.f32 %v274, %v667
      %v700 = vmul.f32 %v275, %v667
      %v701 = vmul.f32 %v276, %v667
      %v702 = vmul.f32 %v277, %v667
      %v703 = vmul.f32 %v658, %v667
      %v704 = vmul.f32 %v659, %v667
      %v705 = vmul.f32 %v660, %v667
      %v706 = vmul.f32 %v661, %v667
      %v707 = vmul.f32 %v662, %v667
      %v708 = vadd.f32 %v613, %v668
      %v709 = vadd.f32 %v614, %v669
      %v710 = vadd.f32 %v615, %v670
      %v711 = vadd.f32 %v616, %v671
      %v712 = vadd.f32 %v617, %v672
      %v713 = vadd.f32 %v618, %v673
      %v714 = vadd.f32 %v619, %v674
      %v715 = vadd.f32 %v620, %v675
      %v716 = vadd.f32 %v621, %v676
      %v717 = vadd.f32 %v622, %v677
      %v718 = vadd.f32 %v623, %v678
      %v719 = vadd.f32 %v624, %v679
      %v720 = vadd.f32 %v625, %v680
      %v721 = vadd.f32 %v626, %v681
      %v722 = vadd.f32 %v627, %v682
      %v723 = vadd.f32 %v628, %v683
      %v724 = vadd.f32 %v629, %v684
      %v725 = vadd.f32 %v630, %v685
      %v726 = vadd.f32 %v631, %v686
      %v727 = vadd.f32 %v632, %v687
      %v728 = vadd.f32 %v633, %v688
      %v729 = vadd.f32 %v634, %v689
      %v730 = vadd.f32 %v635, %v690
      %v731 = vadd.f32 %v636, %v691
      %v732 = vadd.f32 %v637, %v692
      %v733 = vadd.f32 %v638, %v693
      %v734 = vadd.f32 %v639, %v694
      %v735 = vadd.f32 %v640, %v695
      %v736 = vadd.f32 %v641, %v696
      %v737 = vadd.f32 %v642, %v697
      %v738 = vadd.f32 %v643, %v698
      %v739 = vadd.f32 %v644, %v699
      %v740 = vadd.f32 %v645, %v700
      %v741 = vadd.f32 %v646, %v701
      %v742 = vadd.f32 %v647, %v702
      %v743 = vadd.f32 %v648, %v703
      %v744 = vadd.f32 %v649, %v704
      %v745 = vadd.f32 %v650, %v705
      %v746 = vadd.f32 %v651, %v706
      %v747 = vadd.f32 %v652, %v707
      %v748 = vld [vmem:[%s192 + $0x142] sm:$0xff]
      %v749 = vld [vmem:[%s192 + $0x14a] sm:$0xff]
      %v750 = vld [vmem:[%s192 + $0x152] sm:$0xff]
      %v751 = vld [vmem:[%s192 + $0x15a] sm:$0xff]
      %v752 = vld [vmem:[%s192 + $0x162] sm:$0xff]
      %v753 = vmax.f32 %v748, 0.0
      %v754 = vmax.f32 %v749, 0.0
      %v755 = vmax.f32 %v750, 0.0
      %v756 = vmax.f32 %v751, 0.0
      %v757 = vmax.f32 %v752, 0.0
      %v758 = vld [vmem:[%s1 + $0x4] sm:$0x1]
      %v759 = vlaneseq
      %v760 = vshrl.u32 %v759, 7
      %v761 = vsub.s32 0, %v760
      %v762 = vrot.slane %v758, %v761
      %v763 = vmul.f32 %v368, %v762
      %v764 = vmul.f32 %v369, %v762
      %v765 = vmul.f32 %v370, %v762
      %v766 = vmul.f32 %v371, %v762
      %v767 = vmul.f32 %v372, %v762
      %v768 = vmul.f32 %v373, %v762
      %v769 = vmul.f32 %v374, %v762
      %v770 = vmul.f32 %v375, %v762
      %v771 = vmul.f32 %v376, %v762
      %v772 = vmul.f32 %v377, %v762
      %v773 = vmul.f32 %v378, %v762
      %v774 = vmul.f32 %v379, %v762
      %v775 = vmul.f32 %v380, %v762
      %v776 = vmul.f32 %v381, %v762
      %v777 = vmul.f32 %v382, %v762
      %v778 = vmul.f32 %v383, %v762
      %v779 = vmul.f32 %v384, %v762
      %v780 = vmul.f32 %v385, %v762
      %v781 = vmul.f32 %v386, %v762
      %v782 = vmul.f32 %v387, %v762
      %v783 = vmul.f32 %v388, %v762
      %v784 = vmul.f32 %v389, %v762
      %v785 = vmul.f32 %v390, %v762
      %v786 = vmul.f32 %v391, %v762
      %v787 = vmul.f32 %v392, %v762
      %v788 = vmul.f32 %v393, %v762
      %v789 = vmul.f32 %v394, %v762
      %v790 = vmul.f32 %v395, %v762
      %v791 = vmul.f32 %v396, %v762
      %v792 = vmul.f32 %v397, %v762
      %v793 = vmul.f32 %v398, %v762
      %v794 = vmul.f32 %v399, %v762
      %v795 = vmul.f32 %v400, %v762
      %v796 = vmul.f32 %v401, %v762
      %v797 = vmul.f32 %v402, %v762
      %v798 = vmul.f32 %v753, %v762
      %v799 = vmul.f32 %v754, %v762
      %v800 = vmul.f32 %v755, %v762
      %v801 = vmul.f32 %v756, %v762
      %v802 = vmul.f32 %v757, %v762
      %v803 = vadd.f32 %v708, %v763
      %v804 = vadd.f32 %v709, %v764
      %v805 = vadd.f32 %v710, %v765
      %v806 = vadd.f32 %v711, %v766
      %v807 = vadd.f32 %v712, %v767
      %v808 = vadd.f32 %v713, %v768
      %v809 = vadd.f32 %v714, %v769
      %v810 = vadd.f32 %v715, %v770
      %v811 = vadd.f32 %v716, %v771
      %v812 = vadd.f32 %v717, %v772
      %v813 = vadd.f32 %v718, %v773
      %v814 = vadd.f32 %v719, %v774
      %v815 = vadd.f32 %v720, %v775
      %v816 = vadd.f32 %v721, %v776
      %v817 = vadd.f32 %v722, %v777
      %v818 = vadd.f32 %v723, %v778
      %v819 = vadd.f32 %v724, %v779
      %v820 = vadd.f32 %v725, %v780
      %v821 = vadd.f32 %v726, %v781
      %v822 = vadd.f32 %v727, %v782
      %v823 = vadd.f32 %v728, %v783
      %v824 = vadd.f32 %v729, %v784
      %v825 = vadd.f32 %v730, %v785
      %v826 = vadd.f32 %v731, %v786
      %v827 = vadd.f32 %v732, %v787
      %v828 = vadd.f32 %v733, %v788
      %v829 = vadd.f32 %v734, %v789
      %v830 = vadd.f32 %v735, %v790
      %v831 = vadd.f32 %v736, %v791
      %v832 = vadd.f32 %v737, %v792
      %v833 = vadd.f32 %v738, %v793
      %v834 = vadd.f32 %v739, %v794
      %v835 = vadd.f32 %v740, %v795
      %v836 = vadd.f32 %v741, %v796
      %v837 = vadd.f32 %v742, %v797
      %v838 = vadd.f32 %v743, %v798
      %v839 = vadd.f32 %v744, %v799
      %v840 = vadd.f32 %v745, %v800
      %v841 = vadd.f32 %v746, %v801
      %v842 = vadd.f32 %v747, %v802
      %v843 = vld [vmem:[%s192 + $0x144] sm:$0xff]
      %v844 = vld [vmem:[%s192 + $0x14c] sm:$0xff]
      %v845 = vld [vmem:[%s192 + $0x154] sm:$0xff]
      %v846 = vld [vmem:[%s192 + $0x15c] sm:$0xff]
      %v847 = vld [vmem:[%s192 + $0x164] sm:$0xff]
      %v848 = vmax.f32 %v843, 0.0
      %v849 = vmax.f32 %v844, 0.0
      %v850 = vmax.f32 %v845, 0.0
      %v851 = vmax.f32 %v846, 0.0
      %v852 = vmax.f32 %v847, 0.0
      %v853 = vld [vmem:[%s1 + $0x5] sm:$0x1]
      %v854 = vlaneseq
      %v855 = vshrl.u32 %v854, 7
      %v856 = vsub.s32 0, %v855
      %v857 = vrot.slane %v853, %v856
      %v858 = vmul.f32 %v533, %v857
      %v859 = vmul.f32 %v534, %v857
      %v860 = vmul.f32 %v535, %v857
      %v861 = vmul.f32 %v536, %v857
      %v862 = vmul.f32 %v537, %v857
      %v863 = vmul.f32 %v538, %v857
      %v864 = vmul.f32 %v539, %v857
      %v865 = vmul.f32 %v540, %v857
      %v866 = vmul.f32 %v541, %v857
      %v867 = vmul.f32 %v542, %v857
      %v868 = vmul.f32 %v543, %v857
      %v869 = vmul.f32 %v544, %v857
      %v870 = vmul.f32 %v545, %v857
      %v871 = vmul.f32 %v546, %v857
      %v872 = vmul.f32 %v547, %v857
      %v873 = vmul.f32 %v548, %v857
      %v874 = vmul.f32 %v549, %v857
      %v875 = vmul.f32 %v550, %v857
      %v876 = vmul.f32 %v551, %v857
      %v877 = vmul.f32 %v552, %v857
      %v878 = vmul.f32 %v553, %v857
      %v879 = vmul.f32 %v554, %v857
      %v880 = vmul.f32 %v555, %v857
      %v881 = vmul.f32 %v556, %v857
      %v882 = vmul.f32 %v557, %v857
      %v883 = vmul.f32 %v558, %v857
      %v884 = vmul.f32 %v559, %v857
      %v885 = vmul.f32 %v560, %v857
      %v886 = vmul.f32 %v561, %v857
      %v887 = vmul.f32 %v562, %v857
      %v888 = vmul.f32 %v563, %v857
      %v889 = vmul.f32 %v564, %v857
      %v890 = vmul.f32 %v565, %v857
      %v891 = vmul.f32 %v566, %v857
      %v892 = vmul.f32 %v567, %v857
      %v893 = vmul.f32 %v848, %v857
      %v894 = vmul.f32 %v849, %v857
      %v895 = vmul.f32 %v850, %v857
      %v896 = vmul.f32 %v851, %v857
      %v897 = vmul.f32 %v852, %v857
      %v898 = vadd.f32 %v803, %v858
      %v899 = vadd.f32 %v804, %v859
      %v900 = vadd.f32 %v805, %v860
      %v901 = vadd.f32 %v806, %v861
      %v902 = vadd.f32 %v807, %v862
      %v903 = vadd.f32 %v808, %v863
      %v904 = vadd.f32 %v809, %v864
      %v905 = vadd.f32 %v810, %v865
      %v906 = vadd.f32 %v811, %v866
      %v907 = vadd.f32 %v812, %v867
      %v908 = vadd.f32 %v813, %v868
      %v909 = vadd.f32 %v814, %v869
      %v910 = vadd.f32 %v815, %v870
      %v911 = vadd.f32 %v816, %v871
      %v912 = vadd.f32 %v817, %v872
      %v913 = vadd.f32 %v818, %v873
      %v914 = vadd.f32 %v819, %v874
      %v915 = vadd.f32 %v820, %v875
      %v916 = vadd.f32 %v821, %v876
      %v917 = vadd.f32 %v822, %v877
      %v918 = vadd.f32 %v823, %v878
      %v919 = vadd.f32 %v824, %v879
      %v920 = vadd.f32 %v825, %v880
      %v921 = vadd.f32 %v826, %v881
      %v922 = vadd.f32 %v827, %v882
      %v923 = vadd.f32 %v828, %v883
      %v924 = vadd.f32 %v829, %v884
      %v925 = vadd.f32 %v830, %v885
      %v926 = vadd.f32 %v831, %v886
      %v927 = vadd.f32 %v832, %v887
      %v928 = vadd.f32 %v833, %v888
      %v929 = vadd.f32 %v834, %v889
      %v930 = vadd.f32 %v835, %v890
      %v931 = vadd.f32 %v836, %v891
      %v932 = vadd.f32 %v837, %v892
      %v933 = vadd.f32 %v838, %v893
      %v934 = vadd.f32 %v839, %v894
      %v935 = vadd.f32 %v840, %v895
      %v936 = vadd.f32 %v841, %v896
      %v937 = vadd.f32 %v842, %v897
      %v938 = vld [vmem:[%s192 + $0x168] sm:$0xff]
      %v939 = vld [vmem:[%s192 + $0x170] sm:$0xff]
      %v940 = vld [vmem:[%s192 + $0x178] sm:$0xff]
      %v941 = vld [vmem:[%s192 + $0x180] sm:$0xff]
      %v942 = vld [vmem:[%s192 + $0x188] sm:$0xff]
      %v943 = vmax.f32 %v938, 0.0
      %v944 = vmax.f32 %v939, 0.0
      %v945 = vmax.f32 %v940, 0.0
      %v946 = vmax.f32 %v941, 0.0
      %v947 = vmax.f32 %v942, 0.0
      %v948 = vld [vmem:[%s1 + $0x6] sm:$0x1]
      %v949 = vlaneseq
      %v950 = vshrl.u32 %v949, 7
      %v951 = vsub.s32 0, %v950
      %v952 = vrot.slane %v948, %v951
      %v953 = vmul.f32 %v248, %v952
      %v954 = vmul.f32 %v249, %v952
      %v955 = vmul.f32 %v250, %v952
      %v956 = vmul.f32 %v251, %v952
      %v957 = vmul.f32 %v252, %v952
      %v958 = vmul.f32 %v253, %v952
      %v959 = vmul.f32 %v254, %v952
      %v960 = vmul.f32 %v255, %v952
      %v961 = vmul.f32 %v256, %v952
      %v962 = vmul.f32 %v257, %v952
      %v963 = vmul.f32 %v258, %v952
      %v964 = vmul.f32 %v259, %v952
      %v965 = vmul.f32 %v260, %v952
      %v966 = vmul.f32 %v261, %v952
      %v967 = vmul.f32 %v262, %v952
      %v968 = vmul.f32 %v263, %v952
      %v969 = vmul.f32 %v264, %v952
      %v970 = vmul.f32 %v265, %v952
      %v971 = vmul.f32 %v266, %v952
      %v972 = vmul.f32 %v267, %v952
      %v973 = vmul.f32 %v268, %v952
      %v974 = vmul.f32 %v269, %v952
      %v975 = vmul.f32 %v270, %v952
      %v976 = vmul.f32 %v271, %v952
      %v977 = vmul.f32 %v272, %v952
      %v978 = vmul.f32 %v273, %v952
      %v979 = vmul.f32 %v274, %v952
      %v980 = vmul.f32 %v275, %v952
      %v981 = vmul.f32 %v276, %v952
      %v982 = vmul.f32 %v277, %v952
      %v983 = vmul.f32 %v658, %v952
      %v984 = vmul.f32 %v659, %v952
      %v985 = vmul.f32 %v660, %v952
      %v986 = vmul.f32 %v661, %v952
      %v987 = vmul.f32 %v662, %v952
      %v988 = vmul.f32 %v943, %v952
      %v989 = vmul.f32 %v944, %v952
      %v990 = vmul.f32 %v945, %v952
      %v991 = vmul.f32 %v946, %v952
      %v992 = vmul.f32 %v947, %v952
      %v993 = vadd.f32 %v898, %v953
      %v994 = vadd.f32 %v899, %v954
      %v995 = vadd.f32 %v900, %v955
      %v996 = vadd.f32 %v901, %v956
      %v997 = vadd.f32 %v902, %v957
      %v998 = vadd.f32 %v903, %v958
      %v999 = vadd.f32 %v904, %v959
      %v1000 = vadd.f32 %v905, %v960
      %v1001 = vadd.f32 %v906, %v961
      %v1002 = vadd.f32 %v907, %v962
      %v1003 = vadd.f32 %v908, %v963
      %v1004 = vadd.f32 %v909, %v964
      %v1005 = vadd.f32 %v910, %v965
      %v1006 = vadd.f32 %v911, %v966
      %v1007 = vadd.f32 %v912, %v967
      %v1008 = vadd.f32 %v913, %v968
      %v1009 = vadd.f32 %v914, %v969
      %v1010 = vadd.f32 %v915, %v970
      %v1011 = vadd.f32 %v916, %v971
      %v1012 = vadd.f32 %v917, %v972
      %v1013 = vadd.f32 %v918, %v973
      %v1014 = vadd.f32 %v919, %v974
      %v1015 = vadd.f32 %v920, %v975
      %v1016 = vadd.f32 %v921, %v976
      %v1017 = vadd.f32 %v922, %v977
      %v1018 = vadd.f32 %v923, %v978
      %v1019 = vadd.f32 %v924, %v979
      %v1020 = vadd.f32 %v925, %v980
      %v1021 = vadd.f32 %v926, %v981
      %v1022 = vadd.f32 %v927, %v982
      %v1023 = vadd.f32 %v928, %v983
      %v1024 = vadd.f32 %v929, %v984
      %v1025 = vadd.f32 %v930, %v985
      %v1026 = vadd.f32 %v931, %v986
      %v1027 = vadd.f32 %v932, %v987
      %v1028 = vadd.f32 %v933, %v988
      %v1029 = vadd.f32 %v934, %v989
      %v1030 = vadd.f32 %v935, %v990
      %v1031 = vadd.f32 %v936, %v991
      %v1032 = vadd.f32 %v937, %v992
      %v1033 = vld [vmem:[%s192 + $0x16a] sm:$0xff]
      %v1034 = vld [vmem:[%s192 + $0x172] sm:$0xff]
      %v1035 = vld [vmem:[%s192 + $0x17a] sm:$0xff]
      %v1036 = vld [vmem:[%s192 + $0x182] sm:$0xff]
      %v1037 = vld [vmem:[%s192 + $0x18a] sm:$0xff]
      %v1038 = vmax.f32 %v1033, 0.0
      %v1039 = vmax.f32 %v1034, 0.0
      %v1040 = vmax.f32 %v1035, 0.0
      %v1041 = vmax.f32 %v1036, 0.0
      %v1042 = vmax.f32 %v1037, 0.0
      %v1043 = vld [vmem:[%s1 + $0x7] sm:$0x1]
      %v1044 = vlaneseq
      %v1045 = vshrl.u32 %v1044, 7
      %v1046 = vsub.s32 0, %v1045
      %v1047 = vrot.slane %v1043, %v1046
      %v1048 = vmul.f32 %v373, %v1047
      %v1049 = vmul.f32 %v374, %v1047
      %v1050 = vmul.f32 %v375, %v1047
      %v1051 = vmul.f32 %v376, %v1047
      %v1052 = vmul.f32 %v377, %v1047
      %v1053 = vmul.f32 %v378, %v1047
      %v1054 = vmul.f32 %v379, %v1047
      %v1055 = vmul.f32 %v380, %v1047
      %v1056 = vmul.f32 %v381, %v1047
      %v1057 = vmul.f32 %v382, %v1047
      %v1058 = vmul.f32 %v383, %v1047
      %v1059 = vmul.f32 %v384, %v1047
      %v1060 = vmul.f32 %v385, %v1047
      %v1061 = vmul.f32 %v386, %v1047
      %v1062 = vmul.f32 %v387, %v1047
      %v1063 = vmul.f32 %v388, %v1047
      %v1064 = vmul.f32 %v389, %v1047
      %v1065 = vmul.f32 %v390, %v1047
      %v1066 = vmul.f32 %v391, %v1047
      %v1067 = vmul.f32 %v392, %v1047
      %v1068 = vmul.f32 %v393, %v1047
      %v1069 = vmul.f32 %v394, %v1047
      %v1070 = vmul.f32 %v395, %v1047
      %v1071 = vmul.f32 %v396, %v1047
      %v1072 = vmul.f32 %v397, %v1047
      %v1073 = vmul.f32 %v398, %v1047
      %v1074 = vmul.f32 %v399, %v1047
      %v1075 = vmul.f32 %v400, %v1047
      %v1076 = vmul.f32 %v401, %v1047
      %v1077 = vmul.f32 %v402, %v1047
      %v1078 = vmul.f32 %v753, %v1047
      %v1079 = vmul.f32 %v754, %v1047
      %v1080 = vmul.f32 %v755, %v1047
      %v1081 = vmul.f32 %v756, %v1047
      %v1082 = vmul.f32 %v757, %v1047
      %v1083 = vmul.f32 %v1038, %v1047
      %v1084 = vmul.f32 %v1039, %v1047
      %v1085 = vmul.f32 %v1040, %v1047
      %v1086 = vmul.f32 %v1041, %v1047
      %v1087 = vmul.f32 %v1042, %v1047
      %v1088 = vadd.f32 %v993, %v1048
      %v1089 = vadd.f32 %v994, %v1049
      %v1090 = vadd.f32 %v995, %v1050
      %v1091 = vadd.f32 %v996, %v1051
      %v1092 = vadd.f32 %v997, %v1052
      %v1093 = vadd.f32 %v998, %v1053
      %v1094 = vadd.f32 %v999, %v1054
      %v1095 = vadd.f32 %v1000, %v1055
      %v1096 = vadd.f32 %v1001, %v1056
      %v1097 = vadd.f32 %v1002, %v1057
      %v1098 = vadd.f32 %v1003, %v1058
      %v1099 = vadd.f32 %v1004, %v1059
      %v1100 = vadd.f32 %v1005, %v1060
      %v1101 = vadd.f32 %v1006, %v1061
      %v1102 = vadd.f32 %v1007, %v1062
      %v1103 = vadd.f32 %v1008, %v1063
      %v1104 = vadd.f32 %v1009, %v1064
      %v1105 = vadd.f32 %v1010, %v1065
      %v1106 = vadd.f32 %v1011, %v1066
      %v1107 = vadd.f32 %v1012, %v1067
      %v1108 = vadd.f32 %v1013, %v1068
      %v1109 = vadd.f32 %v1014, %v1069
      %v1110 = vadd.f32 %v1015, %v1070
      %v1111 = vadd.f32 %v1016, %v1071
      %v1112 = vadd.f32 %v1017, %v1072
      %v1113 = vadd.f32 %v1018, %v1073
      %v1114 = vadd.f32 %v1019, %v1074
      %v1115 = vadd.f32 %v1020, %v1075
      %v1116 = vadd.f32 %v1021, %v1076
      %v1117 = vadd.f32 %v1022, %v1077
      %v1118 = vadd.f32 %v1023, %v1078
      %v1119 = vadd.f32 %v1024, %v1079
      %v1120 = vadd.f32 %v1025, %v1080
      %v1121 = vadd.f32 %v1026, %v1081
      %v1122 = vadd.f32 %v1027, %v1082
      %v1123 = vadd.f32 %v1028, %v1083
      %v1124 = vadd.f32 %v1029, %v1084
      %v1125 = vadd.f32 %v1030, %v1085
      %v1126 = vadd.f32 %v1031, %v1086
      %v1127 = vadd.f32 %v1032, %v1087
      %v1128 = vld [vmem:[%s192 + $0x16c] sm:$0xff]
      %v1129 = vld [vmem:[%s192 + $0x174] sm:$0xff]
      %v1130 = vld [vmem:[%s192 + $0x17c] sm:$0xff]
      %v1131 = vld [vmem:[%s192 + $0x184] sm:$0xff]
      %v1132 = vld [vmem:[%s192 + $0x18c] sm:$0xff]
      %v1133 = vmax.f32 %v1128, 0.0
      %v1134 = vmax.f32 %v1129, 0.0
      %v1135 = vmax.f32 %v1130, 0.0
      %v1136 = vmax.f32 %v1131, 0.0
      %v1137 = vmax.f32 %v1132, 0.0
      %v1138 = vld [vmem:[%s1 + $0x8] sm:$0x1]
      %v1139 = vlaneseq
      %v1140 = vshrl.u32 %v1139, 7
      %v1141 = vsub.s32 0, %v1140
      %v1142 = vrot.slane %v1138, %v1141
      %v1143 = vmul.f32 %v538, %v1142
      %v1144 = vmul.f32 %v539, %v1142
      %v1145 = vmul.f32 %v540, %v1142
      %v1146 = vmul.f32 %v541, %v1142
      %v1147 = vmul.f32 %v542, %v1142
      %v1148 = vmul.f32 %v543, %v1142
      %v1149 = vmul.f32 %v544, %v1142
      %v1150 = vmul.f32 %v545, %v1142
      %v1151 = vmul.f32 %v546, %v1142
      %v1152 = vmul.f32 %v547, %v1142
      %v1153 = vmul.f32 %v548, %v1142
      %v1154 = vmul.f32 %v549, %v1142
      %v1155 = vmul.f32 %v550, %v1142
      %v1156 = vmul.f32 %v551, %v1142
      %v1157 = vmul.f32 %v552, %v1142
      %v1158 = vmul.f32 %v553, %v1142
      %v1159 = vmul.f32 %v554, %v1142
      %v1160 = vmul.f32 %v555, %v1142
      %v1161 = vmul.f32 %v556, %v1142
      %v1162 = vmul.f32 %v557, %v1142
      %v1163 = vmul.f32 %v558, %v1142
      %v1164 = vmul.f32 %v559, %v1142
      %v1165 = vmul.f32 %v560, %v1142
      %v1166 = vmul.f32 %v561, %v1142
      %v1167 = vmul.f32 %v562, %v1142
      %v1168 = vmul.f32 %v563, %v1142
      %v1169 = vmul.f32 %v564, %v1142
      %v1170 = vmul.f32 %v565, %v1142
      %v1171 = vmul.f32 %v566, %v1142
      %v1172 = vmul.f32 %v567, %v1142
      %v1173 = vmul.f32 %v848, %v1142
      %v1174 = vmul.f32 %v849, %v1142
      %v1175 = vmul.f32 %v850, %v1142
      %v1176 = vmul.f32 %v851, %v1142
      %v1177 = vmul.f32 %v852, %v1142
      %v1178 = vmul.f32 %v1133, %v1142
      %v1179 = vmul.f32 %v1134, %v1142
      %v1180 = vmul.f32 %v1135, %v1142
      %v1181 = vmul.f32 %v1136, %v1142
      %v1182 = vmul.f32 %v1137, %v1142
      %v1183 = vadd.f32 %v1088, %v1143
      %v1184 = vadd.f32 %v1089, %v1144
      %v1185 = vadd.f32 %v1090, %v1145
      %v1186 = vadd.f32 %v1091, %v1146
      %v1187 = vadd.f32 %v1092, %v1147
      %v1188 = vadd.f32 %v1093, %v1148
      %v1189 = vadd.f32 %v1094, %v1149
      %v1190 = vadd.f32 %v1095, %v1150
      %v1191 = vadd.f32 %v1096, %v1151
      %v1192 = vadd.f32 %v1097, %v1152
      %v1193 = vadd.f32 %v1098, %v1153
      %v1194 = vadd.f32 %v1099, %v1154
      %v1195 = vadd.f32 %v1100, %v1155
      %v1196 = vadd.f32 %v1101, %v1156
      %v1197 = vadd.f32 %v1102, %v1157
      %v1198 = vadd.f32 %v1103, %v1158
      %v1199 = vadd.f32 %v1104, %v1159
      %v1200 = vadd.f32 %v1105, %v1160
      %v1201 = vadd.f32 %v1106, %v1161
      %v1202 = vadd.f32 %v1107, %v1162
      %v1203 = vadd.f32 %v1108, %v1163
      %v1204 = vadd.f32 %v1109, %v1164
      %v1205 = vadd.f32 %v1110, %v1165
      %v1206 = vadd.f32 %v1111, %v1166
      %v1207 = vadd.f32 %v1112, %v1167
      %v1208 = vadd.f32 %v1113, %v1168
      %v1209 = vadd.f32 %v1114, %v1169
      %v1210 = vadd.f32 %v1115, %v1170
      %v1211 = vadd.f32 %v1116, %v1171
      %v1212 = vadd.f32 %v1117, %v1172
      %v1213 = vadd.f32 %v1118, %v1173
      %v1214 = vadd.f32 %v1119, %v1174
      %v1215 = vadd.f32 %v1120, %v1175
      %v1216 = vadd.f32 %v1121, %v1176
      %v1217 = vadd.f32 %v1122, %v1177
      %v1218 = vadd.f32 %v1123, %v1178
      %v1219 = vadd.f32 %v1124, %v1179
      %v1220 = vadd.f32 %v1125, %v1180
      %v1221 = vadd.f32 %v1126, %v1181
      %v1222 = vadd.f32 %v1127, %v1182
      %v1223 = vld [vmem:[%s2] sm:$0xf]
      %v1224 = vld [vmem:[%s3] sm:$0x1]
      %v1226 = vlaneseq
      %v1227 = vshrl.u32 %v1226, 7
      %v1228 = vsub.s32 0, %v1227
      %v1229 = vrot.slane %v1224, %v1228
      %vm1231 = vcmask 31744
      %v1233 = vsel %vm1231, %v1183, 0
      %v1236 = vsel %vm1231, %v1184, 0
      %v1239 = vsel %vm1231, %v1185, 0
      %v1242 = vsel %vm1231, %v1186, 0
      %v1245 = vsel %vm1231, %v1187, 0
      %v1248 = vsel %vm1231, %v1188, 0
      %v1251 = vsel %vm1231, %v1189, 0
      %v1254 = vsel %vm1231, %v1190, 0
      %v1257 = vsel %vm1231, %v1191, 0
      %v1260 = vsel %vm1231, %v1192, 0
      %v1263 = vsel %vm1231, %v1193, 0
      %v1266 = vsel %vm1231, %v1194, 0
      %v1269 = vsel %vm1231, %v1195, 0
      %v1272 = vsel %vm1231, %v1196, 0
      %v1275 = vsel %vm1231, %v1197, 0
      %v1278 = vsel %vm1231, %v1198, 0
      %v1281 = vsel %vm1231, %v1199, 0
      %v1284 = vsel %vm1231, %v1200, 0
      %v1287 = vsel %vm1231, %v1201, 0
      %v1290 = vsel %vm1231, %v1202, 0
      %v1293 = vsel %vm1231, %v1203, 0
      %v1296 = vsel %vm1231, %v1204, 0
      %v1299 = vsel %vm1231, %v1205, 0
      %v1302 = vsel %vm1231, %v1206, 0
      %v1305 = vsel %vm1231, %v1207, 0
      %v1308 = vsel %vm1231, %v1208, 0
      %v1311 = vsel %vm1231, %v1209, 0
      %v1314 = vsel %vm1231, %v1210, 0
      %v1317 = vsel %vm1231, %v1211, 0
      %v1320 = vsel %vm1231, %v1212, 0
      %v1323 = vsel %vm1231, %v1213, 0
      %v1326 = vsel %vm1231, %v1214, 0
      %v1329 = vsel %vm1231, %v1215, 0
      %v1332 = vsel %vm1231, %v1216, 0
      %v1335 = vsel %vm1231, %v1217, 0
      %v1338 = vsel %vm1231, %v1218, 0
      %v1341 = vsel %vm1231, %v1219, 0
      %v1344 = vsel %vm1231, %v1220, 0
      %v1347 = vsel %vm1231, %v1221, 0
      %v1350 = vsel %vm1231, %v1222, 0
      %vm1352 = vcmask 1043456
      %v1354 = vsel %vm1352, %v1223, 0
      %1356 = vmatprep.subr.mxu0 0.0
      %1357 = vmatpush1.msra.mxu0 %v1354
      %1358 = vmatprep.subr.mxu0 0.0
      %1359 = vmatpush1.msra.mxu0 0.0
      %1360 = vmatprep.subr.mxu0 0.0
      %1361 = vmatpush1.msra.mxu0 0.0
      %1362 = vmatprep.subr.mxu0 0.0
      %1363 = vmatpush1.msra.mxu0 0.0
      %1364 = vmatprep.subr.mxu0 0.0
      %1365 = vmatpush1.msra.mxu0 0.0
      %1366 = vmatprep.subr.mxu0 0.0
      %1367 = vmatpush1.msra.mxu0 0.0
      %1368 = vmatprep.subr.mxu0 0.0
      %1369 = vmatpush1.msra.mxu0 0.0
      %1370 = vmatprep.subr.mxu0 0.0
      %1371 = vmatpush1.msra.mxu0 0.0
      %1372 = vmatprep.subr.mxu0 0.0
      %1373 = vmatpush1.msra.mxu0 0.0
      %1374 = vmatprep.subr.mxu0 0.0
      %1375 = vmatpush1.msra.mxu0 0.0
      %1376 = vmatprep.subr.mxu0 0.0
      %1377 = vmatpush1.msra.mxu0 0.0
      %1378 = vmatprep.subr.mxu0 0.0
      %1379 = vmatpush1.msra.mxu0 0.0
      %1380 = vmatprep.subr.mxu0 0.0
      %1381 = vmatpush1.msra.mxu0 0.0
      %1382 = vmatprep.subr.mxu0 0.0
      %1383 = vmatpush1.msra.mxu0 0.0
      %1384 = vmatprep.subr.mxu0 0.0
      %1385 = vmatpush1.msra.mxu0 0.0
      %1386 = vmatprep.subr.mxu0 0.0
      %1387 = vmatpush1.msra.mxu0 0.0
      %1388 = vmatprep.subr.mxu0 0.0
      %1389 = vmatpush1.msra.mxu0 0.0
      %1390 = vmatprep.subr.mxu0 0.0
      %1391 = vmatpush1.msra.mxu0 0.0
      %1392 = vmatprep.subr.mxu0 0.0
      %1393 = vmatpush1.msra.mxu0 0.0
      %1394 = vmatprep.subr.mxu0 0.0
      %1395 = vmatpush1.msra.mxu0 0.0
      %1396 = vmatprep.subr.mxu0 0.0
      %1397 = vmatpush1.msra.mxu0 0.0
      %1398 = vmatprep.subr.mxu0 0.0
      %1399 = vmatpush1.msra.mxu0 0.0
      %1400 = vmatprep.subr.mxu0 0.0
      %1401 = vmatpush1.msra.mxu0 0.0
      %1402 = vmatprep.subr.mxu0 0.0
      %1403 = vmatpush1.msra.mxu0 0.0
      %1404 = vmatprep.subr.mxu0 0.0
      %1405 = vmatpush1.msra.mxu0 0.0
      %1406 = vmatprep.subr.mxu0 0.0
      %1407 = vmatpush1.msra.mxu0 0.0
      %1408 = vmatprep.subr.mxu0 0.0
      %1409 = vmatpush1.msra.mxu0 0.0
      %1410 = vmatprep.subr.mxu0 0.0
      %1411 = vmatpush1.msra.mxu0 0.0
      %1412 = vmatprep.subr.mxu0 0.0
      %1413 = vmatpush1.msra.mxu0 0.0
      %1414 = vmatprep.subr.mxu0 0.0
      %1415 = vmatpush1.msra.mxu0 0.0
      %1416 = vmatprep.subr.mxu0 0.0
      %1417 = vmatpush1.msra.mxu0 0.0
      %1418 = vmatprep.subr.mxu0 0.0
      %1419 = vmatpush1.msra.mxu0 0.0
      %1420 = vmatprep.mubr.f32.mxu0 0.0
      %1421 = vmatmul.mubr.f32.gmra.mrb[0].mxu0 %v1233
      %v1422 = vpop.f32.mrb[0].mxu0
      %v1423 = vadd.f32 %v1229, %v1422
      %v1424 = vpop.f32.mrb[0].mxu0
      %1425 = vmatprep.mubr.f32.mxu0 0.0
      %1426 = vmatmul.mubr.f32.gmra.mrb[0].mxu0 %v1236
      %v1427 = vpop.f32.mrb[0].mxu0
      %v1428 = vadd.f32 %v1229, %v1427
      %v1429 = vpop.f32.mrb[0].mxu0
      %1430 = vmatprep.mubr.f32.mxu0 0.0
      %1431 = vmatmul.mubr.f32.gmra.mrb[0].mxu0 %v1239
      %v1432 = vpop.f32.mrb[0].mxu0
      %v1433 = vadd.f32 %v1229, %v1432
      %v1434 = vpop.f32.mrb[0].mxu0
      %1435 = vmatprep.mubr.f32.mxu0 0.0
      %1436 = vmatmul.mubr.f32.gmra.mrb[0].mxu0 %v1242
      %v1437 = vpop.f32.mrb[0].mxu0
      %v1438 = vadd.f32 %v1229, %v1437
      %v1439 = vpop.f32.mrb[0].mxu0
      %1440 = vmatprep.mubr.f32.mxu0 0.0
      %1441 = vmatmul.mubr.f32.gmra.mrb[0].mxu0 %v1245
      %v1442 = vpop.f32.mrb[0].mxu0
      %v1443 = vadd.f32 %v1229, %v1442
      %v1444 = vpop.f32.mrb[0].mxu0
      %1445 = vmatprep.mubr.f32.mxu0 0.0
      %1446 = vmatmul.mubr.f32.gmra.mrb[0].mxu0 %v1248
      %v1447 = vpop.f32.mrb[0].mxu0
      %v1448 = vadd.f32 %v1229, %v1447
      %v1449 = vpop.f32.mrb[0].mxu0
      %1450 = vmatprep.mubr.f32.mxu0 0.0
      %1451 = vmatmul.mubr.f32.gmra.mrb[0].mxu0 %v1251
      %v1452 = vpop.f32.mrb[0].mxu0
      %v1453 = vadd.f32 %v1229, %v1452
      %v1454 = vpop.f32.mrb[0].mxu0
      %1455 = vmatprep.mubr.f32.mxu0 0.0
      %1456 = vmatmul.mubr.f32.gmra.mrb[0].mxu0 %v1254
      %v1457 = vpop.f32.mrb[0].mxu0
      %v1458 = vadd.f32 %v1229, %v1457
      %v1459 = vpop.f32.mrb[0].mxu0
      %1460 = vmatprep.mubr.f32.mxu0 0.0
      %1461 = vmatmul.mubr.f32.gmra.mrb[0].mxu0 %v1257
      %v1462 = vpop.f32.mrb[0].mxu0
      %v1463 = vadd.f32 %v1229, %v1462
      %v1464 = vpop.f32.mrb[0].mxu0
      %1465 = vmatprep.mubr.f32.mxu0 0.0
      %1466 = vmatmul.mubr.f32.gmra.mrb[0].mxu0 %v1260
      %v1467 = vpop.f32.mrb[0].mxu0
      %v1468 = vadd.f32 %v1229, %v1467
      %v1469 = vpop.f32.mrb[0].mxu0
      %1470 = vmatprep.mubr.f32.mxu0 0.0
      %1471 = vmatmul.mubr.f32.gmra.mrb[0].mxu0 %v1263
      %v1472 = vpop.f32.mrb[0].mxu0
      %v1473 = vadd.f32 %v1229, %v1472
      %v1474 = vpop.f32.mrb[0].mxu0
      %1475 = vmatprep.mubr.f32.mxu0 0.0
      %1476 = vmatmul.mubr.f32.gmra.mrb[0].mxu0 %v1266
      %v1477 = vpop.f32.mrb[0].mxu0
      %v1478 = vadd.f32 %v1229, %v1477
      %v1479 = vpop.f32.mrb[0].mxu0
      %1480 = vmatprep.mubr.f32.mxu0 0.0
      %1481 = vmatmul.mubr.f32.gmra.mrb[0].mxu0 %v1269
      %v1482 = vpop.f32.mrb[0].mxu0
      %v1483 = vadd.f32 %v1229, %v1482
      %v1484 = vpop.f32.mrb[0].mxu0
      %1485 = vmatprep.mubr.f32.mxu0 0.0
      %1486 = vmatmul.mubr.f32.gmra.mrb[0].mxu0 %v1272
      %v1487 = vpop.f32.mrb[0].mxu0
      %v1488 = vadd.f32 %v1229, %v1487
      %v1489 = vpop.f32.mrb[0].mxu0
      %1490 = vmatprep.mubr.f32.mxu0 0.0
      %1491 = vmatmul.mubr.f32.gmra.mrb[0].mxu0 %v1275
      %v1492 = vpop.f32.mrb[0].mxu0
      %v1493 = vadd.f32 %v1229, %v1492
      %v1494 = vpop.f32.mrb[0].mxu0
      %1495 = vmatprep.mubr.f32.mxu0 0.0
      %1496 = vmatmul.mubr.f32.gmra.mrb[0].mxu0 %v1278
      %v1497 = vpop.f32.mrb[0].mxu0
      %v1498 = vadd.f32 %v1229, %v1497
      %v1499 = vpop.f32.mrb[0].mxu0
      %1500 = vmatprep.mubr.f32.mxu0 0.0
      %1501 = vmatmul.mubr.f32.gmra.mrb[0].mxu0 %v1281
      %v1502 = vpop.f32.mrb[0].mxu0
      %v1503 = vadd.f32 %v1229, %v1502
      %v1504 = vpop.f32.mrb[0].mxu0
      %1505 = vmatprep.mubr.f32.mxu0 0.0
      %1506 = vmatmul.mubr.f32.gmra.mrb[0].mxu0 %v1284
      %v1507 = vpop.f32.mrb[0].mxu0
      %v1508 = vadd.f32 %v1229, %v1507
      %v1509 = vpop.f32.mrb[0].mxu0
      %1510 = vmatprep.mubr.f32.mxu0 0.0
      %1511 = vmatmul.mubr.f32.gmra.mrb[0].mxu0 %v1287
      %v1512 = vpop.f32.mrb[0].mxu0
      %v1513 = vadd.f32 %v1229, %v1512
      %v1514 = vpop.f32.mrb[0].mxu0
      %1515 = vmatprep.mubr.f32.mxu0 0.0
      %1516 = vmatmul.mubr.f32.gmra.mrb[0].mxu0 %v1290
      %v1517 = vpop.f32.mrb[0].mxu0
      %v1518 = vadd.f32 %v1229, %v1517
      %v1519 = vpop.f32.mrb[0].mxu0
      %1520 = vmatprep.mubr.f32.mxu0 0.0
      %1521 = vmatmul.mubr.f32.gmra.mrb[0].mxu0 %v1293
      %v1522 = vpop.f32.mrb[0].mxu0
      %v1523 = vadd.f32 %v1229, %v1522
      %v1524 = vpop.f32.mrb[0].mxu0
      %1525 = vmatprep.mubr.f32.mxu0 0.0
      %1526 = vmatmul.mubr.f32.gmra.mrb[0].mxu0 %v1296
      %v1527 = vpop.f32.mrb[0].mxu0
      %v1528 = vadd.f32 %v1229, %v1527
      %v1529 = vpop.f32.mrb[0].mxu0
      %1530 = vmatprep.mubr.f32.mxu0 0.0
      %1531 = vmatmul.mubr.f32.gmra.mrb[0].mxu0 %v1299
      %v1532 = vpop.f32.mrb[0].mxu0
      %v1533 = vadd.f32 %v1229, %v1532
      %v1534 = vpop.f32.mrb[0].mxu0
      %1535 = vmatprep.mubr.f32.mxu0 0.0
      %1536 = vmatmul.mubr.f32.gmra.mrb[0].mxu0 %v1302
      %v1537 = vpop.f32.mrb[0].mxu0
      %v1538 = vadd.f32 %v1229, %v1537
      %v1539 = vpop.f32.mrb[0].mxu0
      %1540 = vmatprep.mubr.f32.mxu0 0.0
      %1541 = vmatmul.mubr.f32.gmra.mrb[0].mxu0 %v1305
      %v1542 = vpop.f32.mrb[0].mxu0
      %v1543 = vadd.f32 %v1229, %v1542
      %v1544 = vpop.f32.mrb[0].mxu0
      %1545 = vmatprep.mubr.f32.mxu0 0.0
      %1546 = vmatmul.mubr.f32.gmra.mrb[0].mxu0 %v1308
      %v1547 = vpop.f32.mrb[0].mxu0
      %v1548 = vadd.f32 %v1229, %v1547
      %v1549 = vpop.f32.mrb[0].mxu0
      %1550 = vmatprep.mubr.f32.mxu0 0.0
      %1551 = vmatmul.mubr.f32.gmra.mrb[0].mxu0 %v1311
      %v1552 = vpop.f32.mrb[0].mxu0
      %v1553 = vadd.f32 %v1229, %v1552
      %v1554 = vpop.f32.mrb[0].mxu0
      %1555 = vmatprep.mubr.f32.mxu0 0.0
      %1556 = vmatmul.mubr.f32.gmra.mrb[0].mxu0 %v1314
      %v1557 = vpop.f32.mrb[0].mxu0
      %v1558 = vadd.f32 %v1229, %v1557
      %v1559 = vpop.f32.mrb[0].mxu0
      %1560 = vmatprep.mubr.f32.mxu0 0.0
      %1561 = vmatmul.mubr.f32.gmra.mrb[0].mxu0 %v1317
      %v1562 = vpop.f32.mrb[0].mxu0
      %v1563 = vadd.f32 %v1229, %v1562
      %v1564 = vpop.f32.mrb[0].mxu0
      %1565 = vmatprep.mubr.f32.mxu0 0.0
      %1566 = vmatmul.mubr.f32.gmra.mrb[0].mxu0 %v1320
      %v1567 = vpop.f32.mrb[0].mxu0
      %v1568 = vadd.f32 %v1229, %v1567
      %v1569 = vpop.f32.mrb[0].mxu0
      %1570 = vmatprep.mubr.f32.mxu0 0.0
      %1571 = vmatmul.mubr.f32.gmra.mrb[0].mxu0 %v1323
      %v1572 = vpop.f32.mrb[0].mxu0
      %v1573 = vadd.f32 %v1229, %v1572
      %v1574 = vpop.f32.mrb[0].mxu0
      %1575 = vmatprep.mubr.f32.mxu0 0.0
      %1576 = vmatmul.mubr.f32.gmra.mrb[0].mxu0 %v1326
      %v1577 = vpop.f32.mrb[0].mxu0
      %v1578 = vadd.f32 %v1229, %v1577
      %v1579 = vpop.f32.mrb[0].mxu0
      %1580 = vmatprep.mubr.f32.mxu0 0.0
      %1581 = vmatmul.mubr.f32.gmra.mrb[0].mxu0 %v1329
      %v1582 = vpop.f32.mrb[0].mxu0
      %v1583 = vadd.f32 %v1229, %v1582
      %v1584 = vpop.f32.mrb[0].mxu0
      %1585 = vmatprep.mubr.f32.mxu0 0.0
      %1586 = vmatmul.mubr.f32.gmra.mrb[0].mxu0 %v1332
      %v1587 = vpop.f32.mrb[0].mxu0
      %v1588 = vadd.f32 %v1229, %v1587
      %v1589 = vpop.f32.mrb[0].mxu0
      %1590 = vmatprep.mubr.f32.mxu0 0.0
      %1591 = vmatmul.mubr.f32.gmra.mrb[0].mxu0 %v1335
      %v1592 = vpop.f32.mrb[0].mxu0
      %v1593 = vadd.f32 %v1229, %v1592
      %v1594 = vpop.f32.mrb[0].mxu0
      %1595 = vmatprep.mubr.f32.mxu0 0.0
      %1596 = vmatmul.mubr.f32.gmra.mrb[0].mxu0 %v1338
      %v1597 = vpop.f32.mrb[0].mxu0
      %v1598 = vadd.f32 %v1229, %v1597
      %v1599 = vpop.f32.mrb[0].mxu0
      %1600 = vmatprep.mubr.f32.mxu0 0.0
      %1601 = vmatmul.mubr.f32.gmra.mrb[0].mxu0 %v1341
      %v1602 = vpop.f32.mrb[0].mxu0
      %v1603 = vadd.f32 %v1229, %v1602
      %v1604 = vpop.f32.mrb[0].mxu0
      %1605 = vmatprep.mubr.f32.mxu0 0.0
      %1606 = vmatmul.mubr.f32.gmra.mrb[0].mxu0 %v1344
      %v1607 = vpop.f32.mrb[0].mxu0
      %v1608 = vadd.f32 %v1229, %v1607
      %v1609 = vpop.f32.mrb[0].mxu0
      %1610 = vmatprep.mubr.f32.mxu0 0.0
      %1611 = vmatmul.mubr.f32.gmra.mrb[0].mxu0 %v1347
      %v1612 = vpop.f32.mrb[0].mxu0
      %v1613 = vadd.f32 %v1229, %v1612
      %v1614 = vpop.f32.mrb[0].mxu0
      %1615 = vmatprep.mubr.f32.mxu0 0.0
      %1616 = vmatmul.mubr.f32.gmra.mrb[0].mxu0 %v1350
      %v1617 = vpop.f32.mrb[0].mxu0
      %v1618 = vadd.f32 %v1229, %v1617
      %v1619 = vpop.f32.mrb[0].mxu0
      %1620 = vdwg.mxu0
      %vm1621 = vcmask 64512
      %1622 = vst.msk [vmem:[%s197] sm:$0xff] %vm1621, %v1423
      %1623 = vst.msk [vmem:[%s197 + $0x8] sm:$0xff] %vm1621, %v1428
      %1624 = vst.msk [vmem:[%s197 + $0x10] sm:$0xff] %vm1621, %v1433
      %1625 = vst.msk [vmem:[%s197 + $0x18] sm:$0xff] %vm1621, %v1438
      %1626 = vst.msk [vmem:[%s197 + $0x20] sm:$0xff] %vm1621, %v1443
      %1627 = vst.msk [vmem:[%s197 + $0x28] sm:$0xff] %vm1621, %v1448
      %1628 = vst.msk [vmem:[%s197 + $0x30] sm:$0xff] %vm1621, %v1453
      %1629 = vst.msk [vmem:[%s197 + $0x38] sm:$0xff] %vm1621, %v1458
      %1630 = vst.msk [vmem:[%s197 + $0x40] sm:$0xff] %vm1621, %v1463
      %1631 = vst.msk [vmem:[%s197 + $0x48] sm:$0xff] %vm1621, %v1468
      %1632 = vst.msk [vmem:[%s197 + $0x50] sm:$0xff] %vm1621, %v1473
      %1633 = vst.msk [vmem:[%s197 + $0x58] sm:$0xff] %vm1621, %v1478
      %1634 = vst.msk [vmem:[%s197 + $0x60] sm:$0xff] %vm1621, %v1483
      %1635 = vst.msk [vmem:[%s197 + $0x68] sm:$0xff] %vm1621, %v1488
      %1636 = vst.msk [vmem:[%s197 + $0x70] sm:$0xff] %vm1621, %v1493
      %1637 = vst.msk [vmem:[%s197 + $0x78] sm:$0xff] %vm1621, %v1498
      %1638 = vst.msk [vmem:[%s197 + $0x80] sm:$0xff] %vm1621, %v1503
      %1639 = vst.msk [vmem:[%s197 + $0x88] sm:$0xff] %vm1621, %v1508
      %1640 = vst.msk [vmem:[%s197 + $0x90] sm:$0xff] %vm1621, %v1513
      %1641 = vst.msk [vmem:[%s197 + $0x98] sm:$0xff] %vm1621, %v1518
      %1642 = vst.msk [vmem:[%s197 + $0xa0] sm:$0xff] %vm1621, %v1523
      %1643 = vst.msk [vmem:[%s197 + $0xa8] sm:$0xff] %vm1621, %v1528
      %1644 = vst.msk [vmem:[%s197 + $0xb0] sm:$0xff] %vm1621, %v1533
      %1645 = vst.msk [vmem:[%s197 + $0xb8] sm:$0xff] %vm1621, %v1538
      %1646 = vst.msk [vmem:[%s197 + $0xc0] sm:$0xff] %vm1621, %v1543
      %1647 = vst.msk [vmem:[%s197 + $0xc8] sm:$0xff] %vm1621, %v1548
      %1648 = vst.msk [vmem:[%s197 + $0xd0] sm:$0xff] %vm1621, %v1553
      %1649 = vst.msk [vmem:[%s197 + $0xd8] sm:$0xff] %vm1621, %v1558
      %1650 = vst.msk [vmem:[%s197 + $0xe0] sm:$0xff] %vm1621, %v1563
      %1651 = vst.msk [vmem:[%s197 + $0xe8] sm:$0xff] %vm1621, %v1568
      %1652 = vst.msk [vmem:[%s197 + $0xf0] sm:$0xff] %vm1621, %v1573
      %1653 = vst.msk [vmem:[%s197 + $0xf8] sm:$0xff] %vm1621, %v1578
      %1654 = vst.msk [vmem:[%s197 + $0x100] sm:$0xff] %vm1621, %v1583
      %1655 = vst.msk [vmem:[%s197 + $0x108] sm:$0xff] %vm1621, %v1588
      %1656 = vst.msk [vmem:[%s197 + $0x110] sm:$0xff] %vm1621, %v1593
      %1657 = vst.msk [vmem:[%s197 + $0x118] sm:$0xff] %vm1621, %v1598
      %1658 = vst.msk [vmem:[%s197 + $0x120] sm:$0xff] %vm1621, %v1603
      %1659 = vst.msk [vmem:[%s197 + $0x128] sm:$0xff] %vm1621, %v1608
      %1660 = vst.msk [vmem:[%s197 + $0x130] sm:$0xff] %vm1621, %v1613
      %1661 = vst.msk [vmem:[%s197 + $0x138] sm:$0xff] %vm1621, %v1618
      %p1662 = scmp.lt.s32.totalorder %s15, 1
      %s1663 = scalar_select %p1662, %s15, 1
      %s1664 = smul.addr %s1663, 40
      %s1665 = smul.addr %s1664, 8
      %s1666 = scalar_lea.vmem %s4, %s1665
      // Predicated region
      $region37: #{tpu_custom_call.1} parent=35 // pred_check
        %p1667 = pneg %p122
      $region38: #{tpu_custom_call.1} parent=35 // pred_check_branch
        %1669 = sbr.rel (%p1667) target = $region40
      $region39: #{tpu_custom_call.1} parent=35 // pred_region
        _
      $region40: #{tpu_custom_call.1} parent=35 // pred_fallthru
        _
    $region36: #{tpu_custom_call.1} parent=5 // pred_fallthru
      _
    %p1670 = scmp.le.s32.totalorder 2, %s10
    // Predicated region
    $region41: #{tpu_custom_call.1} parent=5 // pred_check
      %p1671 = pneg %p1670
    $region42: #{tpu_custom_call.1} parent=5 // pred_check_branch
      %1673 = sbr.rel (%p1671) target = $region44
    $region43: #{tpu_custom_call.1} parent=5 // pred_region
      %s1674 = ssub.s32 %s10, 2
      // Predicated region
      $region45: #{tpu_custom_call.1} parent=43 // pred_check
        %p1675 = pneg %p128
      $region46: #{tpu_custom_call.1} parent=43 // pred_check_branch
        %1677 = sbr.rel (%p1675) target = $region48
      $region47: #{tpu_custom_call.1} parent=43 // pred_region
        %p1678 = scmp.lt.s32.totalorder %s16, 1
        %s1679 = scalar_select %p1678, %s16, 1
        %s1680 = smul.addr %s1679, 40
        %s1681 = smul.addr %s1680, 8
        %s1682 = scalar_lea.vmem %s4, %s1681
      $region48: #{tpu_custom_call.1} parent=43 // pred_fallthru
        _
    $region44: #{tpu_custom_call.1} parent=5 // pred_fallthru
      _
  $region6: #{tpu_custom_call.1} parent=0 // loop_footer
    %s14 = sadd.s32 1, %s10
  $region7: #{tpu_custom_call.1} parent=0 // loop_footer_branch
    %9 = sbr.rel target = $region3
  $region8: #{tpu_custom_call.1} parent=0 // loop_exit
    _

</llo_original>
